<compile_context>
chip_gen: v6e
topology: v6e:2x2x1
jax: 0.10.0
libtpu: 0.0.40
codegen_flags: <defaults>
</compile_context>

<pallas_src>
import jax
import jax.numpy as jnp
from jax.experimental import pallas as pl
from jax.experimental.pallas import tpu as pltpu

# ---- model hyper-parameters (consistent with the PyTorch module instantiation) ----
INPUT_SIZE = 4
HIDDEN = 32
NUM_LAYERS = 2
BATCH = 2
SEQ = 8


def timeseries_kernel(
    x_ref,      # (T*B, F)     time-major input rows (row = t*B + b), f32
    wx_ref,     # (4, F, 2H)   per-gate input-proj weights ([layer0 wih0 cols | zeros]), f32
    b_ref,      # (4, 1, 2H)   per-gate biases ([b0_gate | b1_gate]), f32
    wr_ref,     # (4, 2H, 2H)  per-gate recurrent weights on [h0|h1] state, bf16
    wout_ref,   # (1, 2H)      final linear row, zero over layer-0 half, f32
    bout_ref,   # (1, 1)       final linear bias
    out_ref,    # (B, 1)
):
    TB, _ = x_ref.shape
    H2 = wr_ref.shape[-1]          # 2H (layer-0 half | layer-1 half)
    H = H2 // 2
    B = out_ref.shape[0]
    T = TB // B

    # ---- prologue (off the recurrent chain): hoisted layer-0 input projection + biases.
    # One small dot per gate; layer-1 columns of wx are zero, so the layer-1 half of each
    # xp row is just the (constant) layer-1 bias.
    xs = x_ref[...]                                                  # (T*B, F)
    xp = [jnp.dot(xs, wx_ref[k], preferred_element_type=jnp.float32) + b_ref[k]
          for k in range(4)]                                         # 4 x (T*B, 2H) f32
    wr = [wr_ref[k] for k in range(4)]                               # 4 x (2H, 2H) bf16

    # After wavefront step 0, layer-1 state must stay exactly zero (h1_{-1} = c1_{-1} = 0).
    l0_mask = (jax.lax.broadcasted_iota(jnp.int32, (B, H2), 1) < H).astype(jnp.float32)

    # Packed wavefront state: h = [h0_{s-1} | h1_{s-2}], c likewise.
    h = jnp.zeros((B, H2), jnp.float32)
    c = jnp.zeros((B, H2), jnp.float32)

    # ---- wavefront recurrence: step s computes layer-0 cell t=s and layer-1 cell t=s-1.
    # Fully unrolled (T+1 = 9 steps); exactly one dependent matmul group per step.
    for s in range(T + 1):
        r = s if s < T else T - 1          # step T only needs the layer-1 half; reuse a row
        if s == 0:
            # h == 0: recurrent contribution is zero, skip the dots entirely.
            pre = [xp[k][r * B:(r + 1) * B] for k in range(4)]
        else:
            hb = h.astype(jnp.bfloat16)    # bf16 MXU operands, f32 accumulation
            pre = [jnp.dot(hb, wr[k], preferred_element_type=jnp.float32)
                   + xp[k][r * B:(r + 1) * B]
                   for k in range(4)]
        # Per-gate tiles are all (B, 2H) at lane offset 0 -> no relayouts in the cell update.
        i_g = jax.nn.sigmoid(pre[0])
        f_g = jax.nn.sigmoid(pre[1])
        g_g = jnp.tanh(pre[2])
        o_g = jax.nn.sigmoid(pre[3])
        c = f_g * c + i_g * g_g
        h = o_g * jnp.tanh(c)
        if s == 0:
            # zero the (bogus) layer-1 half produced at step 0 so layer 1 starts from 0 state
            h = h * l0_mask
            c = c * l0_mask

    # ---- ReLU on the last layer-1 hidden state + Linear(H, 1).
    # wout is zero over the layer-0 half, so no slice is needed to extract h1_{T-1}.
    act = jax.nn.relu(h)                                             # (B, 2H)
    out_ref[...] = jnp.sum(act * wout_ref[...], axis=-1, keepdims=True) + bout_ref[...]


def pack_params(params):
    """Build the packed, gate-separated kernel operands (wrapper-side layout plumbing)."""
    H, F = HIDDEN, INPUT_SIZE
    wih0 = params["w_ih0"].T        # (F, 4H)
    whh0 = params["w_hh0"].T        # (H, 4H)
    wih1 = params["w_ih1"].T        # (H, 4H)
    whh1 = params["w_hh1"].T        # (H, 4H)
    b0 = params["b_ih0"] + params["b_hh0"]    # (4H,)
    b1 = params["b_ih1"] + params["b_hh1"]    # (4H,)

    wx, bb, wr = [], [], []
    for k in range(4):              # PyTorch gate order: i, f, g, o
        cols = slice(k * H, (k + 1) * H)
        # input projection: layer-0 gets x @ wih0, layer-1 gets nothing (input comes via h0)
        wx.append(jnp.concatenate(
            [wih0[:, cols], jnp.zeros((F, H), jnp.float32)], axis=1))          # (F, 2H)
        bb.append(jnp.concatenate([b0[cols], b1[cols]])[None, :])              # (1, 2H)
        # recurrent weight on packed state [h0 | h1]:
        #   layer-0 gate <- h0 @ whh0 ;  layer-1 gate <- h0 @ wih1 + h1 @ whh1
        top = jnp.concatenate([whh0[:, cols], wih1[:, cols]], axis=1)          # (H, 2H)
        bot = jnp.concatenate([jnp.zeros((H, H), jnp.float32), whh1[:, cols]], axis=1)
        wr.append(jnp.concatenate([top, bot], axis=0))                         # (2H, 2H)

    wx_all = jnp.stack(wx)                          # (4, F, 2H) f32
    b_all = jnp.stack(bb)                           # (4, 1, 2H) f32
    wr_all = jnp.stack(wr).astype(jnp.bfloat16)     # (4, 2H, 2H) bf16  (MXU operands only)
    wout = jnp.concatenate(
        [jnp.zeros((1, H), jnp.float32), params["w_lin"].reshape(1, H)], axis=1)  # (1, 2H)
    bout = params["b_lin"].reshape(1, 1)
    return wx_all, b_all, wr_all, wout, bout


@jax.jit
def timeseries_forward(x, params):
    """x: (B, T, INPUT_SIZE) float32, batch_first like PyTorch."""
    B, T, F = x.shape
    x_tm = jnp.swapaxes(x, 0, 1).reshape(T * B, F)      # time-major rows (layout plumbing)
    wx_all, b_all, wr_all, wout, bout = pack_params(params)

    vmem = pl.BlockSpec(memory_space=pltpu.MemorySpace.VMEM)
    return pl.pallas_call(
        timeseries_kernel,
        out_shape=jax.ShapeDtypeStruct((B, 1), jnp.float32),
        in_specs=[vmem] * 6,
        out_specs=vmem,
    )(x_tm, wx_all, b_all, wr_all, wout, bout)


# ---------------- deterministic parameter init (PyTorch-style uniform) ----------------
def init_params(key):
    k = 1.0 / jnp.sqrt(HIDDEN)
    keys = jax.random.split(key, 12)
    u = lambda kk, shape: jax.random.uniform(kk, shape, jnp.float32, -k, k)
    return {
        "w_ih0": u(keys[0], (4 * HIDDEN, INPUT_SIZE)),
        "w_hh0": u(keys[1], (4 * HIDDEN, HIDDEN)),
        "b_ih0": u(keys[2], (4 * HIDDEN,)),
        "b_hh0": u(keys[3], (4 * HIDDEN,)),
        "w_ih1": u(keys[4], (4 * HIDDEN, HIDDEN)),
        "w_hh1": u(keys[5], (4 * HIDDEN, HIDDEN)),
        "b_ih1": u(keys[6], (4 * HIDDEN,)),
        "b_hh1": u(keys[7], (4 * HIDDEN,)),
        "w_lin": u(keys[8], (1, HIDDEN)),
        "b_lin": u(keys[9], (1,)),
    }


# ---------------- pure-JAX reference (mirrors PyTorch nn.LSTM semantics) ----------------
def reference_forward(x, params, recurrent_dtype=jnp.float32):
    """recurrent_dtype=bfloat16 mirrors the kernel's numerics (bf16 MXU operands for the
    recurrent / layer-1 input matmuls, f32 accumulation; layer-0 input proj stays f32)."""
    B, T, _ = x.shape
    H = HIDDEN
    layer_in = x
    for l in range(NUM_LAYERS):
        wih, whh = params[f"w_ih{l}"].T, params[f"w_hh{l}"].T
        bias = params[f"b_ih{l}"] + params[f"b_hh{l}"]
        wih_c = wih if l == 0 else wih.astype(recurrent_dtype)
        whh_c = whh.astype(recurrent_dtype)

        def step(carry, x_t, wih_c=wih_c, whh_c=whh_c, bias=bias, l=l):
            h, c = carry
            x_in = x_t if l == 0 else x_t.astype(recurrent_dtype)
            gates = (jnp.dot(x_in, wih_c, preferred_element_type=jnp.float32)
                     + jnp.dot(h.astype(recurrent_dtype), whh_c,
                               preferred_element_type=jnp.float32)
                     + bias)
            i, f, g, o = jnp.split(gates, 4, axis=-1)
            i, f, o = jax.nn.sigmoid(i), jax.nn.sigmoid(f), jax.nn.sigmoid(o)
            g = jnp.tanh(g)
            c = f * c + i * g
            h = o * jnp.tanh(c)
            return (h, c), h

        h0 = jnp.zeros((B, H), jnp.float32)
        c0 = jnp.zeros((B, H), jnp.float32)
        _, outs = jax.lax.scan(step, (h0, c0), jnp.transpose(layer_in, (1, 0, 2)))
        layer_in = jnp.transpose(outs, (1, 0, 2))
    last = layer_in[:, -1, :]
    return jax.nn.relu(last) @ params["w_lin"].T + params["b_lin"]


if __name__ == "__main__":
    key = jax.random.PRNGKey(0)
    pkey, xkey = jax.random.split(key)
    params = init_params(pkey)
    x = jax.random.normal(xkey, (BATCH, SEQ, INPUT_SIZE), jnp.float32)

    out = jax.block_until_ready(timeseries_forward(x, params))
    assert out.shape == (BATCH, 1), out.shape

    # Structural check against a reference with the same bf16 recurrent-matmul numerics.
    ref_bf16 = reference_forward(x, params, recurrent_dtype=jnp.bfloat16)
    assert jnp.allclose(out, ref_bf16, atol=5e-3, rtol=5e-3), (out, ref_bf16)

    # Fidelity check against the exact f32 PyTorch-semantics reference (looser tolerance
    # because the kernel intentionally runs the recurrent matmuls in bf16).
    ref_f32 = reference_forward(x, params)
    assert jnp.allclose(out, ref_f32, atol=3e-2, rtol=3e-2), (out, ref_f32)

    print("KERNEL_OK")
</pallas_src>

<mosaic_0001>
module attributes {stable_mosaic.version = 11 : i64} {
  func.func @timeseries_kernel(%arg0: memref<16x4xf32, #tpu.memory_space<vmem>>, %arg1: memref<4x4x64xf32, #tpu.memory_space<vmem>>, %arg2: memref<4x1x64xf32, #tpu.memory_space<vmem>>, %arg3: memref<4x64x64xbf16, #tpu.memory_space<vmem>>, %arg4: memref<1x64xf32, #tpu.memory_space<vmem>>, %arg5: memref<1x1xf32, #tpu.memory_space<vmem>>, %arg6: memref<2x1xf32, #tpu.memory_space<vmem>>) attributes {dimension_semantics = [], scalar_prefetch = 0 : i64, scratch_operands = 0 : i64, tpu.core_type = #tpu.core_type<tc>} {
    %c0 = arith.constant 0 : index
    %c0_0 = arith.constant 0 : index
    %0 = vector.load %arg0[%c0, %c0_0] : memref<16x4xf32, #tpu.memory_space<vmem>>, vector<16x4xf32>
    %c0_1 = arith.constant 0 : index
    %c0_2 = arith.constant 0 : index
    %c0_3 = arith.constant 0 : index
    %1 = vector.load %arg1[%c0_1, %c0_2, %c0_3] : memref<4x4x64xf32, #tpu.memory_space<vmem>>, vector<1x4x64xf32>
    %2 = vector.shape_cast %1 : vector<1x4x64xf32> to vector<4x64xf32>
    %cst = arith.constant dense<0.000000e+00> : vector<16x64xf32>
    %3 = tpu.matmul %0, %2, %cst {dimension_numbers = #tpu.dot_dimension_numbers<[1], [0], [0], [1], [0, 0, 1, 1], [], []>} : vector<16x4xf32>, vector<4x64xf32>, vector<16x64xf32> -> vector<16x64xf32>
    %c0_4 = arith.constant 0 : index
    %c0_5 = arith.constant 0 : index
    %c0_6 = arith.constant 0 : index
    %4 = vector.load %arg2[%c0_4, %c0_5, %c0_6] : memref<4x1x64xf32, #tpu.memory_space<vmem>>, vector<1x1x64xf32>
    %5 = vector.shape_cast %4 : vector<1x1x64xf32> to vector<1x64xf32>
    %6 = vector.broadcast %5 : vector<1x64xf32> to vector<16x64xf32>
    %7 = arith.addf %3, %6 : vector<16x64xf32>
    %c1 = arith.constant 1 : index
    %c0_7 = arith.constant 0 : index
    %c0_8 = arith.constant 0 : index
    %8 = vector.load %arg1[%c1, %c0_7, %c0_8] : memref<4x4x64xf32, #tpu.memory_space<vmem>>, vector<1x4x64xf32>
    %9 = vector.shape_cast %8 : vector<1x4x64xf32> to vector<4x64xf32>
    %cst_9 = arith.constant dense<0.000000e+00> : vector<16x64xf32>
    %10 = tpu.matmul %0, %9, %cst_9 {dimension_numbers = #tpu.dot_dimension_numbers<[1], [0], [0], [1], [0, 0, 1, 1], [], []>} : vector<16x4xf32>, vector<4x64xf32>, vector<16x64xf32> -> vector<16x64xf32>
    %c1_10 = arith.constant 1 : index
    %c0_11 = arith.constant 0 : index
    %c0_12 = arith.constant 0 : index
    %11 = vector.load %arg2[%c1_10, %c0_11, %c0_12] : memref<4x1x64xf32, #tpu.memory_space<vmem>>, vector<1x1x64xf32>
    %12 = vector.shape_cast %11 : vector<1x1x64xf32> to vector<1x64xf32>
    %13 = vector.broadcast %12 : vector<1x64xf32> to vector<16x64xf32>
    %14 = arith.addf %10, %13 : vector<16x64xf32>
    %c2 = arith.constant 2 : index
    %c0_13 = arith.constant 0 : index
    %c0_14 = arith.constant 0 : index
    %15 = vector.load %arg1[%c2, %c0_13, %c0_14] : memref<4x4x64xf32, #tpu.memory_space<vmem>>, vector<1x4x64xf32>
    %16 = vector.shape_cast %15 : vector<1x4x64xf32> to vector<4x64xf32>
    %cst_15 = arith.constant dense<0.000000e+00> : vector<16x64xf32>
    %17 = tpu.matmul %0, %16, %cst_15 {dimension_numbers = #tpu.dot_dimension_numbers<[1], [0], [0], [1], [0, 0, 1, 1], [], []>} : vector<16x4xf32>, vector<4x64xf32>, vector<16x64xf32> -> vector<16x64xf32>
    %c2_16 = arith.constant 2 : index
    %c0_17 = arith.constant 0 : index
    %c0_18 = arith.constant 0 : index
    %18 = vector.load %arg2[%c2_16, %c0_17, %c0_18] : memref<4x1x64xf32, #tpu.memory_space<vmem>>, vector<1x1x64xf32>
    %19 = vector.shape_cast %18 : vector<1x1x64xf32> to vector<1x64xf32>
    %20 = vector.broadcast %19 : vector<1x64xf32> to vector<16x64xf32>
    %21 = arith.addf %17, %20 : vector<16x64xf32>
    %c3 = arith.constant 3 : index
    %c0_19 = arith.constant 0 : index
    %c0_20 = arith.constant 0 : index
    %22 = vector.load %arg1[%c3, %c0_19, %c0_20] : memref<4x4x64xf32, #tpu.memory_space<vmem>>, vector<1x4x64xf32>
    %23 = vector.shape_cast %22 : vector<1x4x64xf32> to vector<4x64xf32>
    %cst_21 = arith.constant dense<0.000000e+00> : vector<16x64xf32>
    %24 = tpu.matmul %0, %23, %cst_21 {dimension_numbers = #tpu.dot_dimension_numbers<[1], [0], [0], [1], [0, 0, 1, 1], [], []>} : vector<16x4xf32>, vector<4x64xf32>, vector<16x64xf32> -> vector<16x64xf32>
    %c3_22 = arith.constant 3 : index
    %c0_23 = arith.constant 0 : index
    %c0_24 = arith.constant 0 : index
    %25 = vector.load %arg2[%c3_22, %c0_23, %c0_24] : memref<4x1x64xf32, #tpu.memory_space<vmem>>, vector<1x1x64xf32>
    %26 = vector.shape_cast %25 : vector<1x1x64xf32> to vector<1x64xf32>
    %27 = vector.broadcast %26 : vector<1x64xf32> to vector<16x64xf32>
    %28 = arith.addf %24, %27 : vector<16x64xf32>
    %c0_25 = arith.constant 0 : index
    %c0_26 = arith.constant 0 : index
    %c0_27 = arith.constant 0 : index
    %29 = vector.load %arg3[%c0_25, %c0_26, %c0_27] : memref<4x64x64xbf16, #tpu.memory_space<vmem>>, vector<1x64x64xbf16>
    %30 = vector.shape_cast %29 : vector<1x64x64xbf16> to vector<64x64xbf16>
    %c1_28 = arith.constant 1 : index
    %c0_29 = arith.constant 0 : index
    %c0_30 = arith.constant 0 : index
    %31 = vector.load %arg3[%c1_28, %c0_29, %c0_30] : memref<4x64x64xbf16, #tpu.memory_space<vmem>>, vector<1x64x64xbf16>
    %32 = vector.shape_cast %31 : vector<1x64x64xbf16> to vector<64x64xbf16>
    %c2_31 = arith.constant 2 : index
    %c0_32 = arith.constant 0 : index
    %c0_33 = arith.constant 0 : index
    %33 = vector.load %arg3[%c2_31, %c0_32, %c0_33] : memref<4x64x64xbf16, #tpu.memory_space<vmem>>, vector<1x64x64xbf16>
    %34 = vector.shape_cast %33 : vector<1x64x64xbf16> to vector<64x64xbf16>
    %c3_34 = arith.constant 3 : index
    %c0_35 = arith.constant 0 : index
    %c0_36 = arith.constant 0 : index
    %35 = vector.load %arg3[%c3_34, %c0_35, %c0_36] : memref<4x64x64xbf16, #tpu.memory_space<vmem>>, vector<1x64x64xbf16>
    %36 = vector.shape_cast %35 : vector<1x64x64xbf16> to vector<64x64xbf16>
    %37 = tpu.iota {dimensions = array<i32: 1>} : vector<2x64xi32>
    %c32_i32 = arith.constant 32 : i32
    %38 = vector.broadcast %c32_i32 : i32 to vector<2x64xi32>
    %39 = arith.cmpi slt, %37, %38 : vector<2x64xi32>
    %40 = arith.extui %39 : vector<2x64xi1> to vector<2x64xi32>
    %41 = arith.sitofp %40 : vector<2x64xi32> to vector<2x64xf32>
    %cst_37 = arith.constant 0.000000e+00 : f32
    %42 = vector.broadcast %cst_37 : f32 to vector<2x64xf32>
    %43 = vector.extract_strided_slice %7 {offsets = [0, 0], sizes = [2, 64], strides = [1, 1]} : vector<16x64xf32> to vector<2x64xf32>
    %44 = vector.extract_strided_slice %14 {offsets = [0, 0], sizes = [2, 64], strides = [1, 1]} : vector<16x64xf32> to vector<2x64xf32>
    %45 = vector.extract_strided_slice %21 {offsets = [0, 0], sizes = [2, 64], strides = [1, 1]} : vector<16x64xf32> to vector<2x64xf32>
    %46 = vector.extract_strided_slice %28 {offsets = [0, 0], sizes = [2, 64], strides = [1, 1]} : vector<16x64xf32> to vector<2x64xf32>
    %47 = arith.negf %43 : vector<2x64xf32>
    %48 = math.exp %47 : vector<2x64xf32>
    %cst_38 = arith.constant 1.000000e+00 : f32
    %49 = vector.broadcast %cst_38 : f32 to vector<2x64xf32>
    %50 = arith.addf %49, %48 : vector<2x64xf32>
    %51 = arith.divf %49, %50 : vector<2x64xf32>
    %52 = arith.negf %44 : vector<2x64xf32>
    %53 = math.exp %52 : vector<2x64xf32>
    %cst_39 = arith.constant 1.000000e+00 : f32
    %54 = vector.broadcast %cst_39 : f32 to vector<2x64xf32>
    %55 = arith.addf %54, %53 : vector<2x64xf32>
    %56 = arith.divf %54, %55 : vector<2x64xf32>
    %57 = math.tanh %45 : vector<2x64xf32>
    %58 = arith.negf %46 : vector<2x64xf32>
    %59 = math.exp %58 : vector<2x64xf32>
    %cst_40 = arith.constant 1.000000e+00 : f32
    %60 = vector.broadcast %cst_40 : f32 to vector<2x64xf32>
    %61 = arith.addf %60, %59 : vector<2x64xf32>
    %62 = arith.divf %60, %61 : vector<2x64xf32>
    %63 = arith.mulf %56, %42 : vector<2x64xf32>
    %64 = arith.mulf %51, %57 : vector<2x64xf32>
    %65 = arith.addf %63, %64 : vector<2x64xf32>
    %66 = math.tanh %65 : vector<2x64xf32>
    %67 = arith.mulf %62, %66 : vector<2x64xf32>
    %68 = arith.mulf %67, %41 : vector<2x64xf32>
    %69 = arith.mulf %65, %41 : vector<2x64xf32>
    %70 = arith.truncf %68 : vector<2x64xf32> to vector<2x64xbf16>
    %cst_41 = arith.constant dense<0.000000e+00> : vector<2x64xf32>
    %71 = tpu.matmul %70, %30, %cst_41 {dimension_numbers = #tpu.dot_dimension_numbers<[1], [0], [0], [1], [0, 0, 1, 1], [], []>} : vector<2x64xbf16>, vector<64x64xbf16>, vector<2x64xf32> -> vector<2x64xf32>
    %72 = vector.extract_strided_slice %7 {offsets = [2, 0], sizes = [2, 64], strides = [1, 1]} : vector<16x64xf32> to vector<2x64xf32>
    %73 = arith.addf %71, %72 : vector<2x64xf32>
    %cst_42 = arith.constant dense<0.000000e+00> : vector<2x64xf32>
    %74 = tpu.matmul %70, %32, %cst_42 {dimension_numbers = #tpu.dot_dimension_numbers<[1], [0], [0], [1], [0, 0, 1, 1], [], []>} : vector<2x64xbf16>, vector<64x64xbf16>, vector<2x64xf32> -> vector<2x64xf32>
    %75 = vector.extract_strided_slice %14 {offsets = [2, 0], sizes = [2, 64], strides = [1, 1]} : vector<16x64xf32> to vector<2x64xf32>
    %76 = arith.addf %74, %75 : vector<2x64xf32>
    %cst_43 = arith.constant dense<0.000000e+00> : vector<2x64xf32>
    %77 = tpu.matmul %70, %34, %cst_43 {dimension_numbers = #tpu.dot_dimension_numbers<[1], [0], [0], [1], [0, 0, 1, 1], [], []>} : vector<2x64xbf16>, vector<64x64xbf16>, vector<2x64xf32> -> vector<2x64xf32>
    %78 = vector.extract_strided_slice %21 {offsets = [2, 0], sizes = [2, 64], strides = [1, 1]} : vector<16x64xf32> to vector<2x64xf32>
    %79 = arith.addf %77, %78 : vector<2x64xf32>
    %cst_44 = arith.constant dense<0.000000e+00> : vector<2x64xf32>
    %80 = tpu.matmul %70, %36, %cst_44 {dimension_numbers = #tpu.dot_dimension_numbers<[1], [0], [0], [1], [0, 0, 1, 1], [], []>} : vector<2x64xbf16>, vector<64x64xbf16>, vector<2x64xf32> -> vector<2x64xf32>
    %81 = vector.extract_strided_slice %28 {offsets = [2, 0], sizes = [2, 64], strides = [1, 1]} : vector<16x64xf32> to vector<2x64xf32>
    %82 = arith.addf %80, %81 : vector<2x64xf32>
    %83 = arith.negf %73 : vector<2x64xf32>
    %84 = math.exp %83 : vector<2x64xf32>
    %cst_45 = arith.constant 1.000000e+00 : f32
    %85 = vector.broadcast %cst_45 : f32 to vector<2x64xf32>
    %86 = arith.addf %85, %84 : vector<2x64xf32>
    %87 = arith.divf %85, %86 : vector<2x64xf32>
    %88 = arith.negf %76 : vector<2x64xf32>
    %89 = math.exp %88 : vector<2x64xf32>
    %cst_46 = arith.constant 1.000000e+00 : f32
    %90 = vector.broadcast %cst_46 : f32 to vector<2x64xf32>
    %91 = arith.addf %90, %89 : vector<2x64xf32>
    %92 = arith.divf %90, %91 : vector<2x64xf32>
    %93 = math.tanh %79 : vector<2x64xf32>
    %94 = arith.negf %82 : vector<2x64xf32>
    %95 = math.exp %94 : vector<2x64xf32>
    %cst_47 = arith.constant 1.000000e+00 : f32
    %96 = vector.broadcast %cst_47 : f32 to vector<2x64xf32>
    %97 = arith.addf %96, %95 : vector<2x64xf32>
    %98 = arith.divf %96, %97 : vector<2x64xf32>
    %99 = arith.mulf %92, %69 : vector<2x64xf32>
    %100 = arith.mulf %87, %93 : vector<2x64xf32>
    %101 = arith.addf %99, %100 : vector<2x64xf32>
    %102 = math.tanh %101 : vector<2x64xf32>
    %103 = arith.mulf %98, %102 : vector<2x64xf32>
    %104 = arith.truncf %103 : vector<2x64xf32> to vector<2x64xbf16>
    %cst_48 = arith.constant dense<0.000000e+00> : vector<2x64xf32>
    %105 = tpu.matmul %104, %30, %cst_48 {dimension_numbers = #tpu.dot_dimension_numbers<[1], [0], [0], [1], [0, 0, 1, 1], [], []>} : vector<2x64xbf16>, vector<64x64xbf16>, vector<2x64xf32> -> vector<2x64xf32>
    %106 = vector.extract_strided_slice %7 {offsets = [4, 0], sizes = [2, 64], strides = [1, 1]} : vector<16x64xf32> to vector<2x64xf32>
    %107 = arith.addf %105, %106 : vector<2x64xf32>
    %cst_49 = arith.constant dense<0.000000e+00> : vector<2x64xf32>
    %108 = tpu.matmul %104, %32, %cst_49 {dimension_numbers = #tpu.dot_dimension_numbers<[1], [0], [0], [1], [0, 0, 1, 1], [], []>} : vector<2x64xbf16>, vector<64x64xbf16>, vector<2x64xf32> -> vector<2x64xf32>
    %109 = vector.extract_strided_slice %14 {offsets = [4, 0], sizes = [2, 64], strides = [1, 1]} : vector<16x64xf32> to vector<2x64xf32>
    %110 = arith.addf %108, %109 : vector<2x64xf32>
    %cst_50 = arith.constant dense<0.000000e+00> : vector<2x64xf32>
    %111 = tpu.matmul %104, %34, %cst_50 {dimension_numbers = #tpu.dot_dimension_numbers<[1], [0], [0], [1], [0, 0, 1, 1], [], []>} : vector<2x64xbf16>, vector<64x64xbf16>, vector<2x64xf32> -> vector<2x64xf32>
    %112 = vector.extract_strided_slice %21 {offsets = [4, 0], sizes = [2, 64], strides = [1, 1]} : vector<16x64xf32> to vector<2x64xf32>
    %113 = arith.addf %111, %112 : vector<2x64xf32>
    %cst_51 = arith.constant dense<0.000000e+00> : vector<2x64xf32>
    %114 = tpu.matmul %104, %36, %cst_51 {dimension_numbers = #tpu.dot_dimension_numbers<[1], [0], [0], [1], [0, 0, 1, 1], [], []>} : vector<2x64xbf16>, vector<64x64xbf16>, vector<2x64xf32> -> vector<2x64xf32>
    %115 = vector.extract_strided_slice %28 {offsets = [4, 0], sizes = [2, 64], strides = [1, 1]} : vector<16x64xf32> to vector<2x64xf32>
    %116 = arith.addf %114, %115 : vector<2x64xf32>
    %117 = arith.negf %107 : vector<2x64xf32>
    %118 = math.exp %117 : vector<2x64xf32>
    %cst_52 = arith.constant 1.000000e+00 : f32
    %119 = vector.broadcast %cst_52 : f32 to vector<2x64xf32>
    %120 = arith.addf %119, %118 : vector<2x64xf32>
    %121 = arith.divf %119, %120 : vector<2x64xf32>
    %122 = arith.negf %110 : vector<2x64xf32>
    %123 = math.exp %122 : vector<2x64xf32>
    %cst_53 = arith.constant 1.000000e+00 : f32
    %124 = vector.broadcast %cst_53 : f32 to vector<2x64xf32>
    %125 = arith.addf %124, %123 : vector<2x64xf32>
    %126 = arith.divf %124, %125 : vector<2x64xf32>
    %127 = math.tanh %113 : vector<2x64xf32>
    %128 = arith.negf %116 : vector<2x64xf32>
    %129 = math.exp %128 : vector<2x64xf32>
    %cst_54 = arith.constant 1.000000e+00 : f32
    %130 = vector.broadcast %cst_54 : f32 to vector<2x64xf32>
    %131 = arith.addf %130, %129 : vector<2x64xf32>
    %132 = arith.divf %130, %131 : vector<2x64xf32>
    %133 = arith.mulf %126, %101 : vector<2x64xf32>
    %134 = arith.mulf %121, %127 : vector<2x64xf32>
    %135 = arith.addf %133, %134 : vector<2x64xf32>
    %136 = math.tanh %135 : vector<2x64xf32>
    %137 = arith.mulf %132, %136 : vector<2x64xf32>
    %138 = arith.truncf %137 : vector<2x64xf32> to vector<2x64xbf16>
    %cst_55 = arith.constant dense<0.000000e+00> : vector<2x64xf32>
    %139 = tpu.matmul %138, %30, %cst_55 {dimension_numbers = #tpu.dot_dimension_numbers<[1], [0], [0], [1], [0, 0, 1, 1], [], []>} : vector<2x64xbf16>, vector<64x64xbf16>, vector<2x64xf32> -> vector<2x64xf32>
    %140 = vector.extract_strided_slice %7 {offsets = [6, 0], sizes = [2, 64], strides = [1, 1]} : vector<16x64xf32> to vector<2x64xf32>
    %141 = arith.addf %139, %140 : vector<2x64xf32>
    %cst_56 = arith.constant dense<0.000000e+00> : vector<2x64xf32>
    %142 = tpu.matmul %138, %32, %cst_56 {dimension_numbers = #tpu.dot_dimension_numbers<[1], [0], [0], [1], [0, 0, 1, 1], [], []>} : vector<2x64xbf16>, vector<64x64xbf16>, vector<2x64xf32> -> vector<2x64xf32>
    %143 = vector.extract_strided_slice %14 {offsets = [6, 0], sizes = [2, 64], strides = [1, 1]} : vector<16x64xf32> to vector<2x64xf32>
    %144 = arith.addf %142, %143 : vector<2x64xf32>
    %cst_57 = arith.constant dense<0.000000e+00> : vector<2x64xf32>
    %145 = tpu.matmul %138, %34, %cst_57 {dimension_numbers = #tpu.dot_dimension_numbers<[1], [0], [0], [1], [0, 0, 1, 1], [], []>} : vector<2x64xbf16>, vector<64x64xbf16>, vector<2x64xf32> -> vector<2x64xf32>
    %146 = vector.extract_strided_slice %21 {offsets = [6, 0], sizes = [2, 64], strides = [1, 1]} : vector<16x64xf32> to vector<2x64xf32>
    %147 = arith.addf %145, %146 : vector<2x64xf32>
    %cst_58 = arith.constant dense<0.000000e+00> : vector<2x64xf32>
    %148 = tpu.matmul %138, %36, %cst_58 {dimension_numbers = #tpu.dot_dimension_numbers<[1], [0], [0], [1], [0, 0, 1, 1], [], []>} : vector<2x64xbf16>, vector<64x64xbf16>, vector<2x64xf32> -> vector<2x64xf32>
    %149 = vector.extract_strided_slice %28 {offsets = [6, 0], sizes = [2, 64], strides = [1, 1]} : vector<16x64xf32> to vector<2x64xf32>
    %150 = arith.addf %148, %149 : vector<2x64xf32>
    %151 = arith.negf %141 : vector<2x64xf32>
    %152 = math.exp %151 : vector<2x64xf32>
    %cst_59 = arith.constant 1.000000e+00 : f32
    %153 = vector.broadcast %cst_59 : f32 to vector<2x64xf32>
    %154 = arith.addf %153, %152 : vector<2x64xf32>
    %155 = arith.divf %153, %154 : vector<2x64xf32>
    %156 = arith.negf %144 : vector<2x64xf32>
    %157 = math.exp %156 : vector<2x64xf32>
    %cst_60 = arith.constant 1.000000e+00 : f32
    %158 = vector.broadcast %cst_60 : f32 to vector<2x64xf32>
    %159 = arith.addf %158, %157 : vector<2x64xf32>
    %160 = arith.divf %158, %159 : vector<2x64xf32>
    %161 = math.tanh %147 : vector<2x64xf32>
    %162 = arith.negf %150 : vector<2x64xf32>
    %163 = math.exp %162 : vector<2x64xf32>
    %cst_61 = arith.constant 1.000000e+00 : f32
    %164 = vector.broadcast %cst_61 : f32 to vector<2x64xf32>
    %165 = arith.addf %164, %163 : vector<2x64xf32>
    %166 = arith.divf %164, %165 : vector<2x64xf32>
    %167 = arith.mulf %160, %135 : vector<2x64xf32>
    %168 = arith.mulf %155, %161 : vector<2x64xf32>
    %169 = arith.addf %167, %168 : vector<2x64xf32>
    %170 = math.tanh %169 : vector<2x64xf32>
    %171 = arith.mulf %166, %170 : vector<2x64xf32>
    %172 = arith.truncf %171 : vector<2x64xf32> to vector<2x64xbf16>
    %cst_62 = arith.constant dense<0.000000e+00> : vector<2x64xf32>
    %173 = tpu.matmul %172, %30, %cst_62 {dimension_numbers = #tpu.dot_dimension_numbers<[1], [0], [0], [1], [0, 0, 1, 1], [], []>} : vector<2x64xbf16>, vector<64x64xbf16>, vector<2x64xf32> -> vector<2x64xf32>
    %174 = vector.extract_strided_slice %7 {offsets = [8, 0], sizes = [2, 64], strides = [1, 1]} : vector<16x64xf32> to vector<2x64xf32>
    %175 = arith.addf %173, %174 : vector<2x64xf32>
    %cst_63 = arith.constant dense<0.000000e+00> : vector<2x64xf32>
    %176 = tpu.matmul %172, %32, %cst_63 {dimension_numbers = #tpu.dot_dimension_numbers<[1], [0], [0], [1], [0, 0, 1, 1], [], []>} : vector<2x64xbf16>, vector<64x64xbf16>, vector<2x64xf32> -> vector<2x64xf32>
    %177 = vector.extract_strided_slice %14 {offsets = [8, 0], sizes = [2, 64], strides = [1, 1]} : vector<16x64xf32> to vector<2x64xf32>
    %178 = arith.addf %176, %177 : vector<2x64xf32>
    %cst_64 = arith.constant dense<0.000000e+00> : vector<2x64xf32>
    %179 = tpu.matmul %172, %34, %cst_64 {dimension_numbers = #tpu.dot_dimension_numbers<[1], [0], [0], [1], [0, 0, 1, 1], [], []>} : vector<2x64xbf16>, vector<64x64xbf16>, vector<2x64xf32> -> vector<2x64xf32>
    %180 = vector.extract_strided_slice %21 {offsets = [8, 0], sizes = [2, 64], strides = [1, 1]} : vector<16x64xf32> to vector<2x64xf32>
    %181 = arith.addf %179, %180 : vector<2x64xf32>
    %cst_65 = arith.constant dense<0.000000e+00> : vector<2x64xf32>
    %182 = tpu.matmul %172, %36, %cst_65 {dimension_numbers = #tpu.dot_dimension_numbers<[1], [0], [0], [1], [0, 0, 1, 1], [], []>} : vector<2x64xbf16>, vector<64x64xbf16>, vector<2x64xf32> -> vector<2x64xf32>
    %183 = vector.extract_strided_slice %28 {offsets = [8, 0], sizes = [2, 64], strides = [1, 1]} : vector<16x64xf32> to vector<2x64xf32>
    %184 = arith.addf %182, %183 : vector<2x64xf32>
    %185 = arith.negf %175 : vector<2x64xf32>
    %186 = math.exp %185 : vector<2x64xf32>
    %cst_66 = arith.constant 1.000000e+00 : f32
    %187 = vector.broadcast %cst_66 : f32 to vector<2x64xf32>
    %188 = arith.addf %187, %186 : vector<2x64xf32>
    %189 = arith.divf %187, %188 : vector<2x64xf32>
    %190 = arith.negf %178 : vector<2x64xf32>
    %191 = math.exp %190 : vector<2x64xf32>
    %cst_67 = arith.constant 1.000000e+00 : f32
    %192 = vector.broadcast %cst_67 : f32 to vector<2x64xf32>
    %193 = arith.addf %192, %191 : vector<2x64xf32>
    %194 = arith.divf %192, %193 : vector<2x64xf32>
    %195 = math.tanh %181 : vector<2x64xf32>
    %196 = arith.negf %184 : vector<2x64xf32>
    %197 = math.exp %196 : vector<2x64xf32>
    %cst_68 = arith.constant 1.000000e+00 : f32
    %198 = vector.broadcast %cst_68 : f32 to vector<2x64xf32>
    %199 = arith.addf %198, %197 : vector<2x64xf32>
    %200 = arith.divf %198, %199 : vector<2x64xf32>
    %201 = arith.mulf %194, %169 : vector<2x64xf32>
    %202 = arith.mulf %189, %195 : vector<2x64xf32>
    %203 = arith.addf %201, %202 : vector<2x64xf32>
    %204 = math.tanh %203 : vector<2x64xf32>
    %205 = arith.mulf %200, %204 : vector<2x64xf32>
    %206 = arith.truncf %205 : vector<2x64xf32> to vector<2x64xbf16>
    %cst_69 = arith.constant dense<0.000000e+00> : vector<2x64xf32>
    %207 = tpu.matmul %206, %30, %cst_69 {dimension_numbers = #tpu.dot_dimension_numbers<[1], [0], [0], [1], [0, 0, 1, 1], [], []>} : vector<2x64xbf16>, vector<64x64xbf16>, vector<2x64xf32> -> vector<2x64xf32>
    %208 = vector.extract_strided_slice %7 {offsets = [10, 0], sizes = [2, 64], strides = [1, 1]} : vector<16x64xf32> to vector<2x64xf32>
    %209 = arith.addf %207, %208 : vector<2x64xf32>
    %cst_70 = arith.constant dense<0.000000e+00> : vector<2x64xf32>
    %210 = tpu.matmul %206, %32, %cst_70 {dimension_numbers = #tpu.dot_dimension_numbers<[1], [0], [0], [1], [0, 0, 1, 1], [], []>} : vector<2x64xbf16>, vector<64x64xbf16>, vector<2x64xf32> -> vector<2x64xf32>
    %211 = vector.extract_strided_slice %14 {offsets = [10, 0], sizes = [2, 64], strides = [1, 1]} : vector<16x64xf32> to vector<2x64xf32>
    %212 = arith.addf %210, %211 : vector<2x64xf32>
    %cst_71 = arith.constant dense<0.000000e+00> : vector<2x64xf32>
    %213 = tpu.matmul %206, %34, %cst_71 {dimension_numbers = #tpu.dot_dimension_numbers<[1], [0], [0], [1], [0, 0, 1, 1], [], []>} : vector<2x64xbf16>, vector<64x64xbf16>, vector<2x64xf32> -> vector<2x64xf32>
    %214 = vector.extract_strided_slice %21 {offsets = [10, 0], sizes = [2, 64], strides = [1, 1]} : vector<16x64xf32> to vector<2x64xf32>
    %215 = arith.addf %213, %214 : vector<2x64xf32>
    %cst_72 = arith.constant dense<0.000000e+00> : vector<2x64xf32>
    %216 = tpu.matmul %206, %36, %cst_72 {dimension_numbers = #tpu.dot_dimension_numbers<[1], [0], [0], [1], [0, 0, 1, 1], [], []>} : vector<2x64xbf16>, vector<64x64xbf16>, vector<2x64xf32> -> vector<2x64xf32>
    %217 = vector.extract_strided_slice %28 {offsets = [10, 0], sizes = [2, 64], strides = [1, 1]} : vector<16x64xf32> to vector<2x64xf32>
    %218 = arith.addf %216, %217 : vector<2x64xf32>
    %219 = arith.negf %209 : vector<2x64xf32>
    %220 = math.exp %219 : vector<2x64xf32>
    %cst_73 = arith.constant 1.000000e+00 : f32
    %221 = vector.broadcast %cst_73 : f32 to vector<2x64xf32>
    %222 = arith.addf %221, %220 : vector<2x64xf32>
    %223 = arith.divf %221, %222 : vector<2x64xf32>
    %224 = arith.negf %212 : vector<2x64xf32>
    %225 = math.exp %224 : vector<2x64xf32>
    %cst_74 = arith.constant 1.000000e+00 : f32
    %226 = vector.broadcast %cst_74 : f32 to vector<2x64xf32>
    %227 = arith.addf %226, %225 : vector<2x64xf32>
    %228 = arith.divf %226, %227 : vector<2x64xf32>
    %229 = math.tanh %215 : vector<2x64xf32>
    %230 = arith.negf %218 : vector<2x64xf32>
    %231 = math.exp %230 : vector<2x64xf32>
    %cst_75 = arith.constant 1.000000e+00 : f32
    %232 = vector.broadcast %cst_75 : f32 to vector<2x64xf32>
    %233 = arith.addf %232, %231 : vector<2x64xf32>
    %234 = arith.divf %232, %233 : vector<2x64xf32>
    %235 = arith.mulf %228, %203 : vector<2x64xf32>
    %236 = arith.mulf %223, %229 : vector<2x64xf32>
    %237 = arith.addf %235, %236 : vector<2x64xf32>
    %238 = math.tanh %237 : vector<2x64xf32>
    %239 = arith.mulf %234, %238 : vector<2x64xf32>
    %240 = arith.truncf %239 : vector<2x64xf32> to vector<2x64xbf16>
    %cst_76 = arith.constant dense<0.000000e+00> : vector<2x64xf32>
    %241 = tpu.matmul %240, %30, %cst_76 {dimension_numbers = #tpu.dot_dimension_numbers<[1], [0], [0], [1], [0, 0, 1, 1], [], []>} : vector<2x64xbf16>, vector<64x64xbf16>, vector<2x64xf32> -> vector<2x64xf32>
    %242 = vector.extract_strided_slice %7 {offsets = [12, 0], sizes = [2, 64], strides = [1, 1]} : vector<16x64xf32> to vector<2x64xf32>
    %243 = arith.addf %241, %242 : vector<2x64xf32>
    %cst_77 = arith.constant dense<0.000000e+00> : vector<2x64xf32>
    %244 = tpu.matmul %240, %32, %cst_77 {dimension_numbers = #tpu.dot_dimension_numbers<[1], [0], [0], [1], [0, 0, 1, 1], [], []>} : vector<2x64xbf16>, vector<64x64xbf16>, vector<2x64xf32> -> vector<2x64xf32>
    %245 = vector.extract_strided_slice %14 {offsets = [12, 0], sizes = [2, 64], strides = [1, 1]} : vector<16x64xf32> to vector<2x64xf32>
    %246 = arith.addf %244, %245 : vector<2x64xf32>
    %cst_78 = arith.constant dense<0.000000e+00> : vector<2x64xf32>
    %247 = tpu.matmul %240, %34, %cst_78 {dimension_numbers = #tpu.dot_dimension_numbers<[1], [0], [0], [1], [0, 0, 1, 1], [], []>} : vector<2x64xbf16>, vector<64x64xbf16>, vector<2x64xf32> -> vector<2x64xf32>
    %248 = vector.extract_strided_slice %21 {offsets = [12, 0], sizes = [2, 64], strides = [1, 1]} : vector<16x64xf32> to vector<2x64xf32>
    %249 = arith.addf %247, %248 : vector<2x64xf32>
    %cst_79 = arith.constant dense<0.000000e+00> : vector<2x64xf32>
    %250 = tpu.matmul %240, %36, %cst_79 {dimension_numbers = #tpu.dot_dimension_numbers<[1], [0], [0], [1], [0, 0, 1, 1], [], []>} : vector<2x64xbf16>, vector<64x64xbf16>, vector<2x64xf32> -> vector<2x64xf32>
    %251 = vector.extract_strided_slice %28 {offsets = [12, 0], sizes = [2, 64], strides = [1, 1]} : vector<16x64xf32> to vector<2x64xf32>
    %252 = arith.addf %250, %251 : vector<2x64xf32>
    %253 = arith.negf %243 : vector<2x64xf32>
    %254 = math.exp %253 : vector<2x64xf32>
    %cst_80 = arith.constant 1.000000e+00 : f32
    %255 = vector.broadcast %cst_80 : f32 to vector<2x64xf32>
    %256 = arith.addf %255, %254 : vector<2x64xf32>
    %257 = arith.divf %255, %256 : vector<2x64xf32>
    %258 = arith.negf %246 : vector<2x64xf32>
    %259 = math.exp %258 : vector<2x64xf32>
    %cst_81 = arith.constant 1.000000e+00 : f32
    %260 = vector.broadcast %cst_81 : f32 to vector<2x64xf32>
    %261 = arith.addf %260, %259 : vector<2x64xf32>
    %262 = arith.divf %260, %261 : vector<2x64xf32>
    %263 = math.tanh %249 : vector<2x64xf32>
    %264 = arith.negf %252 : vector<2x64xf32>
    %265 = math.exp %264 : vector<2x64xf32>
    %cst_82 = arith.constant 1.000000e+00 : f32
    %266 = vector.broadcast %cst_82 : f32 to vector<2x64xf32>
    %267 = arith.addf %266, %265 : vector<2x64xf32>
    %268 = arith.divf %266, %267 : vector<2x64xf32>
    %269 = arith.mulf %262, %237 : vector<2x64xf32>
    %270 = arith.mulf %257, %263 : vector<2x64xf32>
    %271 = arith.addf %269, %270 : vector<2x64xf32>
    %272 = math.tanh %271 : vector<2x64xf32>
    %273 = arith.mulf %268, %272 : vector<2x64xf32>
    %274 = arith.truncf %273 : vector<2x64xf32> to vector<2x64xbf16>
    %cst_83 = arith.constant dense<0.000000e+00> : vector<2x64xf32>
    %275 = tpu.matmul %274, %30, %cst_83 {dimension_numbers = #tpu.dot_dimension_numbers<[1], [0], [0], [1], [0, 0, 1, 1], [], []>} : vector<2x64xbf16>, vector<64x64xbf16>, vector<2x64xf32> -> vector<2x64xf32>
    %276 = vector.extract_strided_slice %7 {offsets = [14, 0], sizes = [2, 64], strides = [1, 1]} : vector<16x64xf32> to vector<2x64xf32>
    %277 = arith.addf %275, %276 : vector<2x64xf32>
    %cst_84 = arith.constant dense<0.000000e+00> : vector<2x64xf32>
    %278 = tpu.matmul %274, %32, %cst_84 {dimension_numbers = #tpu.dot_dimension_numbers<[1], [0], [0], [1], [0, 0, 1, 1], [], []>} : vector<2x64xbf16>, vector<64x64xbf16>, vector<2x64xf32> -> vector<2x64xf32>
    %279 = vector.extract_strided_slice %14 {offsets = [14, 0], sizes = [2, 64], strides = [1, 1]} : vector<16x64xf32> to vector<2x64xf32>
    %280 = arith.addf %278, %279 : vector<2x64xf32>
    %cst_85 = arith.constant dense<0.000000e+00> : vector<2x64xf32>
    %281 = tpu.matmul %274, %34, %cst_85 {dimension_numbers = #tpu.dot_dimension_numbers<[1], [0], [0], [1], [0, 0, 1, 1], [], []>} : vector<2x64xbf16>, vector<64x64xbf16>, vector<2x64xf32> -> vector<2x64xf32>
    %282 = vector.extract_strided_slice %21 {offsets = [14, 0], sizes = [2, 64], strides = [1, 1]} : vector<16x64xf32> to vector<2x64xf32>
    %283 = arith.addf %281, %282 : vector<2x64xf32>
    %cst_86 = arith.constant dense<0.000000e+00> : vector<2x64xf32>
    %284 = tpu.matmul %274, %36, %cst_86 {dimension_numbers = #tpu.dot_dimension_numbers<[1], [0], [0], [1], [0, 0, 1, 1], [], []>} : vector<2x64xbf16>, vector<64x64xbf16>, vector<2x64xf32> -> vector<2x64xf32>
    %285 = vector.extract_strided_slice %28 {offsets = [14, 0], sizes = [2, 64], strides = [1, 1]} : vector<16x64xf32> to vector<2x64xf32>
    %286 = arith.addf %284, %285 : vector<2x64xf32>
    %287 = arith.negf %277 : vector<2x64xf32>
    %288 = math.exp %287 : vector<2x64xf32>
    %cst_87 = arith.constant 1.000000e+00 : f32
    %289 = vector.broadcast %cst_87 : f32 to vector<2x64xf32>
    %290 = arith.addf %289, %288 : vector<2x64xf32>
    %291 = arith.divf %289, %290 : vector<2x64xf32>
    %292 = arith.negf %280 : vector<2x64xf32>
    %293 = math.exp %292 : vector<2x64xf32>
    %cst_88 = arith.constant 1.000000e+00 : f32
    %294 = vector.broadcast %cst_88 : f32 to vector<2x64xf32>
    %295 = arith.addf %294, %293 : vector<2x64xf32>
    %296 = arith.divf %294, %295 : vector<2x64xf32>
    %297 = math.tanh %283 : vector<2x64xf32>
    %298 = arith.negf %286 : vector<2x64xf32>
    %299 = math.exp %298 : vector<2x64xf32>
    %cst_89 = arith.constant 1.000000e+00 : f32
    %300 = vector.broadcast %cst_89 : f32 to vector<2x64xf32>
    %301 = arith.addf %300, %299 : vector<2x64xf32>
    %302 = arith.divf %300, %301 : vector<2x64xf32>
    %303 = arith.mulf %296, %271 : vector<2x64xf32>
    %304 = arith.mulf %291, %297 : vector<2x64xf32>
    %305 = arith.addf %303, %304 : vector<2x64xf32>
    %306 = math.tanh %305 : vector<2x64xf32>
    %307 = arith.mulf %302, %306 : vector<2x64xf32>
    %308 = arith.truncf %307 : vector<2x64xf32> to vector<2x64xbf16>
    %cst_90 = arith.constant dense<0.000000e+00> : vector<2x64xf32>
    %309 = tpu.matmul %308, %30, %cst_90 {dimension_numbers = #tpu.dot_dimension_numbers<[1], [0], [0], [1], [0, 0, 1, 1], [], []>} : vector<2x64xbf16>, vector<64x64xbf16>, vector<2x64xf32> -> vector<2x64xf32>
    %310 = vector.extract_strided_slice %7 {offsets = [14, 0], sizes = [2, 64], strides = [1, 1]} : vector<16x64xf32> to vector<2x64xf32>
    %311 = arith.addf %309, %310 : vector<2x64xf32>
    %cst_91 = arith.constant dense<0.000000e+00> : vector<2x64xf32>
    %312 = tpu.matmul %308, %32, %cst_91 {dimension_numbers = #tpu.dot_dimension_numbers<[1], [0], [0], [1], [0, 0, 1, 1], [], []>} : vector<2x64xbf16>, vector<64x64xbf16>, vector<2x64xf32> -> vector<2x64xf32>
    %313 = vector.extract_strided_slice %14 {offsets = [14, 0], sizes = [2, 64], strides = [1, 1]} : vector<16x64xf32> to vector<2x64xf32>
    %314 = arith.addf %312, %313 : vector<2x64xf32>
    %cst_92 = arith.constant dense<0.000000e+00> : vector<2x64xf32>
    %315 = tpu.matmul %308, %34, %cst_92 {dimension_numbers = #tpu.dot_dimension_numbers<[1], [0], [0], [1], [0, 0, 1, 1], [], []>} : vector<2x64xbf16>, vector<64x64xbf16>, vector<2x64xf32> -> vector<2x64xf32>
    %316 = vector.extract_strided_slice %21 {offsets = [14, 0], sizes = [2, 64], strides = [1, 1]} : vector<16x64xf32> to vector<2x64xf32>
    %317 = arith.addf %315, %316 : vector<2x64xf32>
    %cst_93 = arith.constant dense<0.000000e+00> : vector<2x64xf32>
    %318 = tpu.matmul %308, %36, %cst_93 {dimension_numbers = #tpu.dot_dimension_numbers<[1], [0], [0], [1], [0, 0, 1, 1], [], []>} : vector<2x64xbf16>, vector<64x64xbf16>, vector<2x64xf32> -> vector<2x64xf32>
    %319 = vector.extract_strided_slice %28 {offsets = [14, 0], sizes = [2, 64], strides = [1, 1]} : vector<16x64xf32> to vector<2x64xf32>
    %320 = arith.addf %318, %319 : vector<2x64xf32>
    %321 = arith.negf %311 : vector<2x64xf32>
    %322 = math.exp %321 : vector<2x64xf32>
    %cst_94 = arith.constant 1.000000e+00 : f32
    %323 = vector.broadcast %cst_94 : f32 to vector<2x64xf32>
    %324 = arith.addf %323, %322 : vector<2x64xf32>
    %325 = arith.divf %323, %324 : vector<2x64xf32>
    %326 = arith.negf %314 : vector<2x64xf32>
    %327 = math.exp %326 : vector<2x64xf32>
    %cst_95 = arith.constant 1.000000e+00 : f32
    %328 = vector.broadcast %cst_95 : f32 to vector<2x64xf32>
    %329 = arith.addf %328, %327 : vector<2x64xf32>
    %330 = arith.divf %328, %329 : vector<2x64xf32>
    %331 = math.tanh %317 : vector<2x64xf32>
    %332 = arith.negf %320 : vector<2x64xf32>
    %333 = math.exp %332 : vector<2x64xf32>
    %cst_96 = arith.constant 1.000000e+00 : f32
    %334 = vector.broadcast %cst_96 : f32 to vector<2x64xf32>
    %335 = arith.addf %334, %333 : vector<2x64xf32>
    %336 = arith.divf %334, %335 : vector<2x64xf32>
    %337 = arith.mulf %330, %305 : vector<2x64xf32>
    %338 = arith.mulf %325, %331 : vector<2x64xf32>
    %339 = arith.addf %337, %338 : vector<2x64xf32>
    %340 = math.tanh %339 : vector<2x64xf32>
    %341 = arith.mulf %336, %340 : vector<2x64xf32>
    %cst_97 = arith.constant 0.000000e+00 : f32
    %342 = vector.broadcast %cst_97 : f32 to vector<2x64xf32>
    %343 = arith.maximumf %341, %342 : vector<2x64xf32>
    %c0_98 = arith.constant 0 : index
    %c0_99 = arith.constant 0 : index
    %344 = vector.load %arg4[%c0_98, %c0_99] : memref<1x64xf32, #tpu.memory_space<vmem>>, vector<1x64xf32>
    %345 = vector.broadcast %344 : vector<1x64xf32> to vector<2x64xf32>
    %346 = arith.mulf %343, %345 : vector<2x64xf32>
    %cst_100 = arith.constant dense<0.000000e+00> : vector<2xf32>
    %347 = vector.multi_reduction <add>, %346, %cst_100 [1] : vector<2x64xf32> to vector<2xf32>
    %348 = vector.shape_cast %347 : vector<2xf32> to vector<2x1xf32>
    %c0_101 = arith.constant 0 : index
    %c0_102 = arith.constant 0 : index
    %349 = vector.load %arg5[%c0_101, %c0_102] : memref<1x1xf32, #tpu.memory_space<vmem>>, vector<1x1xf32>
    %350 = vector.broadcast %349 : vector<1x1xf32> to vector<2x1xf32>
    %351 = arith.addf %348, %350 : vector<2x1xf32>
    %c0_103 = arith.constant 0 : index
    %c0_104 = arith.constant 0 : index
    %352 = vector.load %arg6[%c0_103, %c0_104] : memref<2x1xf32, #tpu.memory_space<vmem>>, vector<2x1xf32>
    tpu.vector_store %arg6[%c0_103, %c0_104], %351 {strides = array<i32>} : memref<2x1xf32, #tpu.memory_space<vmem>>, vector<2x1xf32>,
    return
  }
}

</mosaic_0001>

<llo_original>
// kernel: timeseries_forward.1
$region0: #{timeseries_forward.1}
  #allocation0 [shape = 'u32[]', space=smem, size = 0x4, offset = 0x4, fixed_abs, tag = 'smem constant byte address 0x4 - core index']
  #allocation1 [shape = 'u32[144,128]{1,0:T(1,128)}', space=vmem, size = 0x12000, scoped, tag = 'internal scratch']
  #allocation2 [shape = 'f32[1,1]{1,0:T(1,128)S(1)}', space=vmem, size = 0x200, scoped, tag = 'scoped memory for timeseries_forward.1']
  %s0 = inlined_call_operand.vmem [shape: f32[16,4], index: 0, kind: input, shape index: {}]
  %s1 = inlined_call_operand.vmem [shape: f32[4,4,64], index: 1, kind: input, shape index: {}]
  %s2 = inlined_call_operand.vmem [shape: f32[4,1,64], index: 2, kind: input, shape index: {}]
  %s3 = inlined_call_operand.vmem [shape: bf16[4,64,64], index: 3, kind: input, shape index: {}]
  %s4 = inlined_call_operand.vmem [shape: f32[1,64], index: 4, kind: input, shape index: {}]
  %s5 = inlined_call_operand.<no memory space> [shape: f32[1,1], index: 5, kind: input, shape index: {}]
  %s6 = inlined_call_operand.vmem [shape: f32[2,1], index: 6, kind: output, shape index: {}]
  %s7 = sld [smem:[#allocation0]]
  $region34: #{timeseries_forward.1} parent=0
    _
  %s9 = ssub.s32 1, %s7
  %s10 = scalar_select 0, %s9, %s7
  %v11 = vstv %s5
  %12 = vst [vmem:[#allocation2] sm:$0x1] %v11
  // Predicated region
  $region2: #{timeseries_forward.1} parent=0 // pred_check
    _
  $region3: #{timeseries_forward.1} parent=0 // pred_check_branch
    %14 = sbr.rel (0) target = $region5
  $region4: #{timeseries_forward.1} parent=0 // pred_region
    _
  $region5: #{timeseries_forward.1} parent=0 // pred_fallthru
    _
  // Predicated region
  $region6: #{timeseries_forward.1} parent=0 // pred_check
    _
  $region7: #{timeseries_forward.1} parent=0 // pred_check_branch
    %16 = sbr.rel (0) target = $region9
  $region8: #{timeseries_forward.1} parent=0 // pred_region
    _
  $region9: #{timeseries_forward.1} parent=0 // pred_fallthru
    _
  // Predicated region
  $region10: #{timeseries_forward.1} parent=0 // pred_check
    _
  $region11: #{timeseries_forward.1} parent=0 // pred_check_branch
    %18 = sbr.rel (0) target = $region13
  $region12: #{timeseries_forward.1} parent=0 // pred_region
    _
  $region13: #{timeseries_forward.1} parent=0 // pred_fallthru
    _
  // Predicated region
  $region14: #{timeseries_forward.1} parent=0 // pred_check
    _
  $region15: #{timeseries_forward.1} parent=0 // pred_check_branch
    %20 = sbr.rel (0) target = $region17
  $region16: #{timeseries_forward.1} parent=0 // pred_region
    _
  $region17: #{timeseries_forward.1} parent=0 // pred_fallthru
    _
  // Predicated region
  $region18: #{timeseries_forward.1} parent=0 // pred_check
    _
  $region19: #{timeseries_forward.1} parent=0 // pred_check_branch
    %22 = sbr.rel (0) target = $region21
  $region20: #{timeseries_forward.1} parent=0 // pred_region
    _
  $region21: #{timeseries_forward.1} parent=0 // pred_fallthru
    _
  // Predicated region
  $region22: #{timeseries_forward.1} parent=0 // pred_check
    _
  $region23: #{timeseries_forward.1} parent=0 // pred_check_branch
    %24 = sbr.rel (0) target = $region25
  $region24: #{timeseries_forward.1} parent=0 // pred_region
    _
  $region25: #{timeseries_forward.1} parent=0 // pred_fallthru
    _
  %v26 = vld [vmem:[%s0] sm:$0xff]
  %v27 = vld [vmem:[%s0 + $0x8] sm:$0xff]
  %v28 = vld [vmem:[%s1] sm:$0xf]
  %v29 = vld [vmem:[%s2] sm:$0x1]
  %v31 = vlaneseq
  %v32 = vshrl.u32 %v31, 7
  %v33 = vsub.s32 0, %v32
  %v34 = vrot.slane %v29, %v33
  %vm36 = vcmask 31744
  %v38 = vsel %vm36, %v26, 0
  %v41 = vsel %vm36, %v27, 0
  %vm43 = vcmask 1043456
  %v45 = vsel %vm43, %v28, 0
  %47 = vmatprep.subr.mxu0 0.0
  %48 = vmatpush1.msra.mxu0 0.0
  %49 = vmatprep.subr.mxu0 0.0
  %50 = vmatpush1.msra.mxu0 0.0
  %51 = vmatprep.subr.mxu0 0.0
  %52 = vmatpush1.msra.mxu0 0.0
  %53 = vmatprep.subr.mxu0 0.0
  %54 = vmatpush1.msra.mxu0 0.0
  %55 = vmatprep.subr.mxu0 0.0
  %56 = vmatpush1.msra.mxu0 0.0
  %57 = vmatprep.subr.mxu0 0.0
  %58 = vmatpush1.msra.mxu0 0.0
  %59 = vmatprep.subr.mxu0 0.0
  %60 = vmatpush1.msra.mxu0 0.0
  %61 = vmatprep.subr.mxu0 0.0
  %62 = vmatpush1.msra.mxu0 0.0
  %63 = vmatprep.subr.mxu0 0.0
  %64 = vmatpush1.msra.mxu0 0.0
  %65 = vmatprep.subr.mxu0 0.0
  %66 = vmatpush1.msra.mxu0 0.0
  %67 = vmatprep.subr.mxu0 0.0
  %68 = vmatpush1.msra.mxu0 0.0
  %69 = vmatprep.subr.mxu0 0.0
  %70 = vmatpush1.msra.mxu0 0.0
  %71 = vmatprep.subr.mxu0 0.0
  %72 = vmatpush1.msra.mxu0 0.0
  %73 = vmatprep.subr.mxu0 0.0
  %74 = vmatpush1.msra.mxu0 0.0
  %75 = vmatprep.subr.mxu0 0.0
  %76 = vmatpush1.msra.mxu0 0.0
  %77 = vmatprep.subr.mxu0 0.0
  %78 = vmatpush1.msra.mxu0 %v45
  %79 = vmatprep.subr.mxu0 0.0
  %80 = vmatpush2.msra.mxu0 0.0
  %81 = vmatprep.subr.mxu0 0.0
  %82 = vmatpush2.msra.mxu0 0.0
  %83 = vmatprep.subr.mxu0 0.0
  %84 = vmatpush2.msra.mxu0 0.0
  %85 = vmatprep.subr.mxu0 0.0
  %86 = vmatpush2.msra.mxu0 0.0
  %87 = vmatprep.subr.mxu0 0.0
  %88 = vmatpush2.msra.mxu0 0.0
  %89 = vmatprep.subr.mxu0 0.0
  %90 = vmatpush2.msra.mxu0 0.0
  %91 = vmatprep.subr.mxu0 0.0
  %92 = vmatpush2.msra.mxu0 0.0
  %93 = vmatprep.subr.mxu0 0.0
  %94 = vmatpush2.msra.mxu0 0.0
  %95 = vmatprep.subr.mxu0 0.0
  %96 = vmatpush2.msra.mxu0 0.0
  %97 = vmatprep.subr.mxu0 0.0
  %98 = vmatpush2.msra.mxu0 0.0
  %99 = vmatprep.subr.mxu0 0.0
  %100 = vmatpush2.msra.mxu0 0.0
  %101 = vmatprep.subr.mxu0 0.0
  %102 = vmatpush2.msra.mxu0 0.0
  %103 = vmatprep.subr.mxu0 0.0
  %104 = vmatpush2.msra.mxu0 0.0
  %105 = vmatprep.subr.mxu0 0.0
  %106 = vmatpush2.msra.mxu0 0.0
  %107 = vmatprep.subr.mxu0 0.0
  %108 = vmatpush2.msra.mxu0 0.0
  %109 = vmatprep.subr.mxu0 0.0
  %110 = vmatpush2.msra.mxu0 0.0
  %111 = vmatprep.mubr.f32.mxu0 0.0
  %112 = vmatmul.mubr.f32.gmra.mxu0 %v38
  %v113 = vpop.f32.mrf.mxu0
  %v114 = vadd.f32 %v34, %v113
  %v115 = vpop.f32.mrf.mxu0
  %116 = vmatprep.mubr.f32.mxu0 0.0
  %117 = vmatmul.mubr.f32.gmra.mxu0 %v41
  %v118 = vpop.f32.mrf.mxu0
  %v119 = vadd.f32 %v34, %v118
  %v120 = vpop.f32.mrf.mxu0
  %121 = vdwg.mxu0
  %s122 = scalar_lea.vmem %s1, 4
  %v123 = vld [vmem:[%s122] sm:$0xf]
  %s124 = scalar_lea.vmem %s2, 1
  %v125 = vld [vmem:[%s124] sm:$0x1]
  %v127 = vlaneseq
  %v128 = vshrl.u32 %v127, 7
  %v129 = vsub.s32 0, %v128
  %v130 = vrot.slane %v125, %v129
  %v133 = vsel %vm43, %v123, 0
  %135 = vmatprep.subr.mxu0 0.0
  %136 = vmatpush1.msra.mxu0 0.0
  %137 = vmatprep.subr.mxu0 0.0
  %138 = vmatpush1.msra.mxu0 0.0
  %139 = vmatprep.subr.mxu0 0.0
  %140 = vmatpush1.msra.mxu0 0.0
  %141 = vmatprep.subr.mxu0 0.0
  %142 = vmatpush1.msra.mxu0 0.0
  %143 = vmatprep.subr.mxu0 0.0
  %144 = vmatpush1.msra.mxu0 0.0
  %145 = vmatprep.subr.mxu0 0.0
  %146 = vmatpush1.msra.mxu0 0.0
  %147 = vmatprep.subr.mxu0 0.0
  %148 = vmatpush1.msra.mxu0 0.0
  %149 = vmatprep.subr.mxu0 0.0
  %150 = vmatpush1.msra.mxu0 0.0
  %151 = vmatprep.subr.mxu0 0.0
  %152 = vmatpush1.msra.mxu0 0.0
  %153 = vmatprep.subr.mxu0 0.0
  %154 = vmatpush1.msra.mxu0 0.0
  %155 = vmatprep.subr.mxu0 0.0
  %156 = vmatpush1.msra.mxu0 0.0
  %157 = vmatprep.subr.mxu0 0.0
  %158 = vmatpush1.msra.mxu0 0.0
  %159 = vmatprep.subr.mxu0 0.0
  %160 = vmatpush1.msra.mxu0 0.0
  %161 = vmatprep.subr.mxu0 0.0
  %162 = vmatpush1.msra.mxu0 0.0
  %163 = vmatprep.subr.mxu0 0.0
  %164 = vmatpush1.msra.mxu0 0.0
  %165 = vmatprep.subr.mxu0 0.0
  %166 = vmatpush1.msra.mxu0 %v133
  %167 = vmatprep.subr.mxu0 0.0
  %168 = vmatpush2.msra.mxu0 0.0
  %169 = vmatprep.subr.mxu0 0.0
  %170 = vmatpush2.msra.mxu0 0.0
  %171 = vmatprep.subr.mxu0 0.0
  %172 = vmatpush2.msra.mxu0 0.0
  %173 = vmatprep.subr.mxu0 0.0
  %174 = vmatpush2.msra.mxu0 0.0
  %175 = vmatprep.subr.mxu0 0.0
  %176 = vmatpush2.msra.mxu0 0.0
  %177 = vmatprep.subr.mxu0 0.0
  %178 = vmatpush2.msra.mxu0 0.0
  %179 = vmatprep.subr.mxu0 0.0
  %180 = vmatpush2.msra.mxu0 0.0
  %181 = vmatprep.subr.mxu0 0.0
  %182 = vmatpush2.msra.mxu0 0.0
  %183 = vmatprep.subr.mxu0 0.0
  %184 = vmatpush2.msra.mxu0 0.0
  %185 = vmatprep.subr.mxu0 0.0
  %186 = vmatpush2.msra.mxu0 0.0
  %187 = vmatprep.subr.mxu0 0.0
  %188 = vmatpush2.msra.mxu0 0.0
  %189 = vmatprep.subr.mxu0 0.0
  %190 = vmatpush2.msra.mxu0 0.0
  %191 = vmatprep.subr.mxu0 0.0
  %192 = vmatpush2.msra.mxu0 0.0
  %193 = vmatprep.subr.mxu0 0.0
  %194 = vmatpush2.msra.mxu0 0.0
  %195 = vmatprep.subr.mxu0 0.0
  %196 = vmatpush2.msra.mxu0 0.0
  %197 = vmatprep.subr.mxu0 0.0
  %198 = vmatpush2.msra.mxu0 0.0
  %199 = vmatprep.mubr.f32.mxu0 0.0
  %200 = vmatmul.mubr.f32.gmra.mxu0 %v38
  %v201 = vpop.f32.mrf.mxu0
  %v202 = vadd.f32 %v130, %v201
  %v203 = vpop.f32.mrf.mxu0
  %204 = vmatprep.mubr.f32.mxu0 0.0
  %205 = vmatmul.mubr.f32.gmra.mxu0 %v41
  %v206 = vpop.f32.mrf.mxu0
  %v207 = vadd.f32 %v130, %v206
  %v208 = vpop.f32.mrf.mxu0
  %209 = vdwg.mxu0
  %s210 = scalar_lea.vmem %s1, 8
  %v211 = vld [vmem:[%s210] sm:$0xf]
  %s212 = scalar_lea.vmem %s2, 2
  %v213 = vld [vmem:[%s212] sm:$0x1]
  %v215 = vlaneseq
  %v216 = vshrl.u32 %v215, 7
  %v217 = vsub.s32 0, %v216
  %v218 = vrot.slane %v213, %v217
  %v221 = vsel %vm43, %v211, 0
  %223 = vmatprep.subr.mxu0 0.0
  %224 = vmatpush1.msra.mxu0 0.0
  %225 = vmatprep.subr.mxu0 0.0
  %226 = vmatpush1.msra.mxu0 0.0
  %227 = vmatprep.subr.mxu0 0.0
  %228 = vmatpush1.msra.mxu0 0.0
  %229 = vmatprep.subr.mxu0 0.0
  %230 = vmatpush1.msra.mxu0 0.0
  %231 = vmatprep.subr.mxu0 0.0
  %232 = vmatpush1.msra.mxu0 0.0
  %233 = vmatprep.subr.mxu0 0.0
  %234 = vmatpush1.msra.mxu0 0.0
  %235 = vmatprep.subr.mxu0 0.0
  %236 = vmatpush1.msra.mxu0 0.0
  %237 = vmatprep.subr.mxu0 0.0
  %238 = vmatpush1.msra.mxu0 0.0
  %239 = vmatprep.subr.mxu0 0.0
  %240 = vmatpush1.msra.mxu0 0.0
  %241 = vmatprep.subr.mxu0 0.0
  %242 = vmatpush1.msra.mxu0 0.0
  %243 = vmatprep.subr.mxu0 0.0
  %244 = vmatpush1.msra.mxu0 0.0
  %245 = vmatprep.subr.mxu0 0.0
  %246 = vmatpush1.msra.mxu0 0.0
  %247 = vmatprep.subr.mxu0 0.0
  %248 = vmatpush1.msra.mxu0 0.0
  %249 = vmatprep.subr.mxu0 0.0
  %250 = vmatpush1.msra.mxu0 0.0
  %251 = vmatprep.subr.mxu0 0.0
  %252 = vmatpush1.msra.mxu0 0.0
  %253 = vmatprep.subr.mxu0 0.0
  %254 = vmatpush1.msra.mxu0 %v221
  %255 = vmatprep.subr.mxu0 0.0
  %256 = vmatpush2.msra.mxu0 0.0
  %257 = vmatprep.subr.mxu0 0.0
  %258 = vmatpush2.msra.mxu0 0.0
  %259 = vmatprep.subr.mxu0 0.0
  %260 = vmatpush2.msra.mxu0 0.0
  %261 = vmatprep.subr.mxu0 0.0
  %262 = vmatpush2.msra.mxu0 0.0
  %263 = vmatprep.subr.mxu0 0.0
  %264 = vmatpush2.msra.mxu0 0.0
  %265 = vmatprep.subr.mxu0 0.0
  %266 = vmatpush2.msra.mxu0 0.0
  %267 = vmatprep.subr.mxu0 0.0
  %268 = vmatpush2.msra.mxu0 0.0
  %269 = vmatprep.subr.mxu0 0.0
  %270 = vmatpush2.msra.mxu0 0.0
  %271 = vmatprep.subr.mxu0 0.0
  %272 = vmatpush2.msra.mxu0 0.0
  %273 = vmatprep.subr.mxu0 0.0
  %274 = vmatpush2.msra.mxu0 0.0
  %275 = vmatprep.subr.mxu0 0.0
  %276 = vmatpush2.msra.mxu0 0.0
  %277 = vmatprep.subr.mxu0 0.0
  %278 = vmatpush2.msra.mxu0 0.0
  %279 = vmatprep.subr.mxu0 0.0
  %280 = vmatpush2.msra.mxu0 0.0
  %281 = vmatprep.subr.mxu0 0.0
  %282 = vmatpush2.msra.mxu0 0.0
  %283 = vmatprep.subr.mxu0 0.0
  %284 = vmatpush2.msra.mxu0 0.0
  %285 = vmatprep.subr.mxu0 0.0
  %286 = vmatpush2.msra.mxu0 0.0
  %287 = vmatprep.mubr.f32.mxu0 0.0
  %288 = vmatmul.mubr.f32.gmra.mxu0 %v38
  %v289 = vpop.f32.mrf.mxu0
  %v290 = vadd.f32 %v218, %v289
  %v291 = vpop.f32.mrf.mxu0
  %292 = vmatprep.mubr.f32.mxu0 0.0
  %293 = vmatmul.mubr.f32.gmra.mxu0 %v41
  %v294 = vpop.f32.mrf.mxu0
  %v295 = vadd.f32 %v218, %v294
  %v296 = vpop.f32.mrf.mxu0
  %297 = vdwg.mxu0
  %s298 = scalar_lea.vmem %s1, 12
  %v299 = vld [vmem:[%s298] sm:$0xf]
  %s300 = scalar_lea.vmem %s2, 3
  %v301 = vld [vmem:[%s300] sm:$0x1]
  %v303 = vlaneseq
  %v304 = vshrl.u32 %v303, 7
  %v305 = vsub.s32 0, %v304
  %v306 = vrot.slane %v301, %v305
  %v309 = vsel %vm43, %v299, 0
  %311 = vmatprep.subr.mxu0 0.0
  %312 = vmatpush1.msra.mxu0 0.0
  %313 = vmatprep.subr.mxu0 0.0
  %314 = vmatpush1.msra.mxu0 0.0
  %315 = vmatprep.subr.mxu0 0.0
  %316 = vmatpush1.msra.mxu0 0.0
  %317 = vmatprep.subr.mxu0 0.0
  %318 = vmatpush1.msra.mxu0 0.0
  %319 = vmatprep.subr.mxu0 0.0
  %320 = vmatpush1.msra.mxu0 0.0
  %321 = vmatprep.subr.mxu0 0.0
  %322 = vmatpush1.msra.mxu0 0.0
  %323 = vmatprep.subr.mxu0 0.0
  %324 = vmatpush1.msra.mxu0 0.0
  %325 = vmatprep.subr.mxu0 0.0
  %326 = vmatpush1.msra.mxu0 0.0
  %327 = vmatprep.subr.mxu0 0.0
  %328 = vmatpush1.msra.mxu0 0.0
  %329 = vmatprep.subr.mxu0 0.0
  %330 = vmatpush1.msra.mxu0 0.0
  %331 = vmatprep.subr.mxu0 0.0
  %332 = vmatpush1.msra.mxu0 0.0
  %333 = vmatprep.subr.mxu0 0.0
  %334 = vmatpush1.msra.mxu0 0.0
  %335 = vmatprep.subr.mxu0 0.0
  %336 = vmatpush1.msra.mxu0 0.0
  %337 = vmatprep.subr.mxu0 0.0
  %338 = vmatpush1.msra.mxu0 0.0
  %339 = vmatprep.subr.mxu0 0.0
  %340 = vmatpush1.msra.mxu0 0.0
  %341 = vmatprep.subr.mxu0 0.0
  %342 = vmatpush1.msra.mxu0 %v309
  %343 = vmatprep.subr.mxu0 0.0
  %344 = vmatpush2.msra.mxu0 0.0
  %345 = vmatprep.subr.mxu0 0.0
  %346 = vmatpush2.msra.mxu0 0.0
  %347 = vmatprep.subr.mxu0 0.0
  %348 = vmatpush2.msra.mxu0 0.0
  %349 = vmatprep.subr.mxu0 0.0
  %350 = vmatpush2.msra.mxu0 0.0
  %351 = vmatprep.subr.mxu0 0.0
  %352 = vmatpush2.msra.mxu0 0.0
  %353 = vmatprep.subr.mxu0 0.0
  %354 = vmatpush2.msra.mxu0 0.0
  %355 = vmatprep.subr.mxu0 0.0
  %356 = vmatpush2.msra.mxu0 0.0
  %357 = vmatprep.subr.mxu0 0.0
  %358 = vmatpush2.msra.mxu0 0.0
  %359 = vmatprep.subr.mxu0 0.0
  %360 = vmatpush2.msra.mxu0 0.0
  %361 = vmatprep.subr.mxu0 0.0
  %362 = vmatpush2.msra.mxu0 0.0
  %363 = vmatprep.subr.mxu0 0.0
  %364 = vmatpush2.msra.mxu0 0.0
  %365 = vmatprep.subr.mxu0 0.0
  %366 = vmatpush2.msra.mxu0 0.0
  %367 = vmatprep.subr.mxu0 0.0
  %368 = vmatpush2.msra.mxu0 0.0
  %369 = vmatprep.subr.mxu0 0.0
  %370 = vmatpush2.msra.mxu0 0.0
  %371 = vmatprep.subr.mxu0 0.0
  %372 = vmatpush2.msra.mxu0 0.0
  %373 = vmatprep.subr.mxu0 0.0
  %374 = vmatpush2.msra.mxu0 0.0
  %375 = vmatprep.mubr.f32.mxu0 0.0
  %376 = vmatmul.mubr.f32.gmra.mxu0 %v38
  %v377 = vpop.f32.mrf.mxu0
  %v378 = vadd.f32 %v306, %v377
  %v379 = vpop.f32.mrf.mxu0
  %380 = vmatprep.mubr.f32.mxu0 0.0
  %381 = vmatmul.mubr.f32.gmra.mxu0 %v41
  %v382 = vpop.f32.mrf.mxu0
  %v383 = vadd.f32 %v306, %v382
  %v384 = vpop.f32.mrf.mxu0
  %385 = vdwg.mxu0
  %v386 = vld [vmem:[%s3] sm:$0xf]
  %v387 = vld [vmem:[%s3 + $0x4] sm:$0xf]
  %v388 = vld [vmem:[%s3 + $0x8] sm:$0xf]
  %v389 = vld [vmem:[%s3 + $0xc] sm:$0xf]
  %v390 = vld [vmem:[%s3 + $0x10] sm:$0xf]
  %v391 = vld [vmem:[%s3 + $0x14] sm:$0xf]
  %v392 = vld [vmem:[%s3 + $0x18] sm:$0xf]
  %v393 = vld [vmem:[%s3 + $0x1c] sm:$0xf]
  %s394 = scalar_lea.vmem %s3, 32
  %v395 = vld [vmem:[%s394] sm:$0xf]
  %v396 = vld [vmem:[%s394 + $0x4] sm:$0xf]
  %v397 = vld [vmem:[%s394 + $0x8] sm:$0xf]
  %v398 = vld [vmem:[%s394 + $0xc] sm:$0xf]
  %v399 = vld [vmem:[%s394 + $0x10] sm:$0xf]
  %v400 = vld [vmem:[%s394 + $0x14] sm:$0xf]
  %v401 = vld [vmem:[%s394 + $0x18] sm:$0xf]
  %v402 = vld [vmem:[%s394 + $0x1c] sm:$0xf]
  %s403 = scalar_lea.vmem %s3, 64
  %v404 = vld [vmem:[%s403] sm:$0xf]
  %v405 = vld [vmem:[%s403 + $0x4] sm:$0xf]
  %v406 = vld [vmem:[%s403 + $0x8] sm:$0xf]
  %v407 = vld [vmem:[%s403 + $0xc] sm:$0xf]
  %v408 = vld [vmem:[%s403 + $0x10] sm:$0xf]
  %v409 = vld [vmem:[%s403 + $0x14] sm:$0xf]
  %v410 = vld [vmem:[%s403 + $0x18] sm:$0xf]
  %v411 = vld [vmem:[%s403 + $0x1c] sm:$0xf]
  %s412 = scalar_lea.vmem %s3, 96
  %v413 = vld [vmem:[%s412] sm:$0xf]
  %v414 = vld [vmem:[%s412 + $0x4] sm:$0xf]
  %v415 = vld [vmem:[%s412 + $0x8] sm:$0xf]
  %v416 = vld [vmem:[%s412 + $0xc] sm:$0xf]
  %v417 = vld [vmem:[%s412 + $0x10] sm:$0xf]
  %v418 = vld [vmem:[%s412 + $0x14] sm:$0xf]
  %v419 = vld [vmem:[%s412 + $0x18] sm:$0xf]
  %v420 = vld [vmem:[%s412 + $0x1c] sm:$0xf]
  %v421 = vlaneseq
  %v422 = vand.u32 %v421, 127
  %vm423 = vcmp.lt.s32.totalorder %v422, 32
  %v424 = vsel %vm423, 1, 0
  %v425 = vcvt.s32.f32 %v424
  %v426 = vxor.u32 %v114, 2147483648
  %v427 = vmul.f32 %v426, 1.442695
  %v428 = vpow.pop %v427
  %v429 = vadd.f32 %v428, 1.0
  %v430 = vrcp.pop %v429
  %v431 = vmul.f32 1.0, %v430
  %v432 = vxor.u32 %v202, 2147483648
  %v433 = vmul.f32 %v432, 1.442695
  %v434 = vpow.pop %v433
  %v435 = vadd.f32 %v434, 1.0
  %v436 = vrcp.pop %v435
  %v437 = vmul.f32 1.0, %v436
  %v438 = vtanh.pop %v290
  %v439 = vxor.u32 %v378, 2147483648
  %v440 = vmul.f32 %v439, 1.442695
  %v441 = vpow.pop %v440
  %v442 = vadd.f32 %v441, 1.0
  %v443 = vrcp.pop %v442
  %v444 = vmul.f32 1.0, %v443
  %v445 = vmul.f32 %v437, 0.0
  %v446 = vmul.f32 %v431, %v438
  %v447 = vadd.f32 %v445, %v446
  %v448 = vtanh.pop %v447
  %v449 = vmul.f32 %v444, %v448
  %v450 = vmul.f32 %v449, %v425
  %v451 = vmul.f32 %v447, %v425
  %v452 = vpack.c.bf16 %v450, %v450
  %v461 = vunpack.c.l.b16 %v386
  %v462 = vunpack.c.l.b16 %v387
  %v463 = vunpack.c.l.b16 %v388
  %v464 = vunpack.c.l.b16 %v389
  %v465 = vunpack.c.l.b16 %v390
  %v466 = vunpack.c.l.b16 %v391
  %v467 = vunpack.c.l.b16 %v392
  %v468 = vunpack.c.l.b16 %v393
  %v469 = vpack.c.b16 %v462, %v461
  %v470 = vpack.c.b16 %v464, %v463
  %v471 = vpack.c.b16 %v466, %v465
  %v472 = vpack.c.b16 %v468, %v467
  %v478 = vrot.slane %v114, 2
  %vm480 = vcmask 523264
  %v482 = vsel %vm480, %v452, 0
  %484 = vmatprep.subr.bf16.mxu0 0
  %485 = vmatpush1.bf16.msra.mxu0 0
  %486 = vmatprep.subr.bf16.mxu0 0
  %487 = vmatpush1.bf16.msra.mxu0 0
  %488 = vmatprep.subr.bf16.mxu0 0
  %489 = vmatpush1.bf16.msra.mxu0 0
  %490 = vmatprep.subr.bf16.mxu0 0
  %491 = vmatpush1.bf16.msra.mxu0 0
  %492 = vmatprep.subr.bf16.mxu0 0
  %493 = vmatpush1.bf16.msra.mxu0 %v472
  %494 = vmatprep.subr.bf16.mxu0 0
  %495 = vmatpush1.bf16.msra.mxu0 %v471
  %496 = vmatprep.subr.bf16.mxu0 0
  %497 = vmatpush1.bf16.msra.mxu0 %v470
  %498 = vmatprep.subr.bf16.mxu0 0
  %499 = vmatpush1.bf16.msra.mxu0 %v469
  %500 = vmatprep.subr.bf16.mxu0 0
  %501 = vmatpush2.bf16.msra.mxu0 0
  %502 = vmatprep.subr.bf16.mxu0 0
  %503 = vmatpush2.bf16.msra.mxu0 0
  %504 = vmatprep.subr.bf16.mxu0 0
  %505 = vmatpush2.bf16.msra.mxu0 0
  %506 = vmatprep.subr.bf16.mxu0 0
  %507 = vmatpush2.bf16.msra.mxu0 0
  %508 = vmatprep.subr.bf16.mxu0 0
  %509 = vmatpush2.bf16.msra.mxu0 0
  %510 = vmatprep.subr.bf16.mxu0 0
  %511 = vmatpush2.bf16.msra.mxu0 0
  %512 = vmatprep.subr.bf16.mxu0 0
  %513 = vmatpush2.bf16.msra.mxu0 0
  %514 = vmatprep.subr.bf16.mxu0 0
  %515 = vmatpush2.bf16.msra.mxu0 0
  %516 = vmatprep.mubr.bf16.mxu0 0
  %517 = vmatmul.mubr.bf16.gmra.mxu0 %v482
  %v518 = vpop.f32.mrf.mxu0
  %v519 = vadd.f32 %v478, %v518
  %v520 = vpop.f32.mrf.mxu0
  %v521 = vpop.f32.mrf.mxu0
  %v522 = vpop.f32.mrf.mxu0
  %523 = vdwg.mxu0
  %v532 = vunpack.c.l.b16 %v395
  %v533 = vunpack.c.l.b16 %v396
  %v534 = vunpack.c.l.b16 %v397
  %v535 = vunpack.c.l.b16 %v398
  %v536 = vunpack.c.l.b16 %v399
  %v537 = vunpack.c.l.b16 %v400
  %v538 = vunpack.c.l.b16 %v401
  %v539 = vunpack.c.l.b16 %v402
  %v540 = vpack.c.b16 %v533, %v532
  %v541 = vpack.c.b16 %v535, %v534
  %v542 = vpack.c.b16 %v537, %v536
  %v543 = vpack.c.b16 %v539, %v538
  %v549 = vrot.slane %v202, 2
  %551 = vmatprep.subr.bf16.mxu0 0
  %552 = vmatpush1.bf16.msra.mxu0 0
  %553 = vmatprep.subr.bf16.mxu0 0
  %554 = vmatpush1.bf16.msra.mxu0 0
  %555 = vmatprep.subr.bf16.mxu0 0
  %556 = vmatpush1.bf16.msra.mxu0 0
  %557 = vmatprep.subr.bf16.mxu0 0
  %558 = vmatpush1.bf16.msra.mxu0 0
  %559 = vmatprep.subr.bf16.mxu0 0
  %560 = vmatpush1.bf16.msra.mxu0 %v543
  %561 = vmatprep.subr.bf16.mxu0 0
  %562 = vmatpush1.bf16.msra.mxu0 %v542
  %563 = vmatprep.subr.bf16.mxu0 0
  %564 = vmatpush1.bf16.msra.mxu0 %v541
  %565 = vmatprep.subr.bf16.mxu0 0
  %566 = vmatpush1.bf16.msra.mxu0 %v540
  %567 = vmatprep.subr.bf16.mxu0 0
  %568 = vmatpush2.bf16.msra.mxu0 0
  %569 = vmatprep.subr.bf16.mxu0 0
  %570 = vmatpush2.bf16.msra.mxu0 0
  %571 = vmatprep.subr.bf16.mxu0 0
  %572 = vmatpush2.bf16.msra.mxu0 0
  %573 = vmatprep.subr.bf16.mxu0 0
  %574 = vmatpush2.bf16.msra.mxu0 0
  %575 = vmatprep.subr.bf16.mxu0 0
  %576 = vmatpush2.bf16.msra.mxu0 0
  %577 = vmatprep.subr.bf16.mxu0 0
  %578 = vmatpush2.bf16.msra.mxu0 0
  %579 = vmatprep.subr.bf16.mxu0 0
  %580 = vmatpush2.bf16.msra.mxu0 0
  %581 = vmatprep.subr.bf16.mxu0 0
  %582 = vmatpush2.bf16.msra.mxu0 0
  %583 = vmatprep.mubr.bf16.mxu0 0
  %584 = vmatmul.mubr.bf16.gmra.mxu0 %v482
  %v585 = vpop.f32.mrf.mxu0
  %v586 = vadd.f32 %v549, %v585
  %v587 = vpop.f32.mrf.mxu0
  %v588 = vpop.f32.mrf.mxu0
  %v589 = vpop.f32.mrf.mxu0
  %590 = vdwg.mxu0
  %v599 = vunpack.c.l.b16 %v404
  %v600 = vunpack.c.l.b16 %v405
  %v601 = vunpack.c.l.b16 %v406
  %v602 = vunpack.c.l.b16 %v407
  %v603 = vunpack.c.l.b16 %v408
  %v604 = vunpack.c.l.b16 %v409
  %v605 = vunpack.c.l.b16 %v410
  %v606 = vunpack.c.l.b16 %v411
  %v607 = vpack.c.b16 %v600, %v599
  %v608 = vpack.c.b16 %v602, %v601
  %v609 = vpack.c.b16 %v604, %v603
  %v610 = vpack.c.b16 %v606, %v605
  %v616 = vrot.slane %v290, 2
  %618 = vmatprep.subr.bf16.mxu0 0
  %619 = vmatpush1.bf16.msra.mxu0 0
  %620 = vmatprep.subr.bf16.mxu0 0
  %621 = vmatpush1.bf16.msra.mxu0 0
  %622 = vmatprep.subr.bf16.mxu0 0
  %623 = vmatpush1.bf16.msra.mxu0 0
  %624 = vmatprep.subr.bf16.mxu0 0
  %625 = vmatpush1.bf16.msra.mxu0 0
  %626 = vmatprep.subr.bf16.mxu0 0
  %627 = vmatpush1.bf16.msra.mxu0 %v610
  %628 = vmatprep.subr.bf16.mxu0 0
  %629 = vmatpush1.bf16.msra.mxu0 %v609
  %630 = vmatprep.subr.bf16.mxu0 0
  %631 = vmatpush1.bf16.msra.mxu0 %v608
  %632 = vmatprep.subr.bf16.mxu0 0
  %633 = vmatpush1.bf16.msra.mxu0 %v607
  %634 = vmatprep.subr.bf16.mxu0 0
  %635 = vmatpush2.bf16.msra.mxu0 0
  %636 = vmatprep.subr.bf16.mxu0 0
  %637 = vmatpush2.bf16.msra.mxu0 0
  %638 = vmatprep.subr.bf16.mxu0 0
  %639 = vmatpush2.bf16.msra.mxu0 0
  %640 = vmatprep.subr.bf16.mxu0 0
  %641 = vmatpush2.bf16.msra.mxu0 0
  %642 = vmatprep.subr.bf16.mxu0 0
  %643 = vmatpush2.bf16.msra.mxu0 0
  %644 = vmatprep.subr.bf16.mxu0 0
  %645 = vmatpush2.bf16.msra.mxu0 0
  %646 = vmatprep.subr.bf16.mxu0 0
  %647 = vmatpush2.bf16.msra.mxu0 0
  %648 = vmatprep.subr.bf16.mxu0 0
  %649 = vmatpush2.bf16.msra.mxu0 0
  %650 = vmatprep.mubr.bf16.mxu0 0
  %651 = vmatmul.mubr.bf16.gmra.mxu0 %v482
  %v652 = vpop.f32.mrf.mxu0
  %v653 = vadd.f32 %v616, %v652
  %v654 = vpop.f32.mrf.mxu0
  %v655 = vpop.f32.mrf.mxu0
  %v656 = vpop.f32.mrf.mxu0
  %657 = vdwg.mxu0
  %v666 = vunpack.c.l.b16 %v413
  %v667 = vunpack.c.l.b16 %v414
  %v668 = vunpack.c.l.b16 %v415
  %v669 = vunpack.c.l.b16 %v416
  %v670 = vunpack.c.l.b16 %v417
  %v671 = vunpack.c.l.b16 %v418
  %v672 = vunpack.c.l.b16 %v419
  %v673 = vunpack.c.l.b16 %v420
  %v674 = vpack.c.b16 %v667, %v666
  %v675 = vpack.c.b16 %v669, %v668
  %v676 = vpack.c.b16 %v671, %v670
  %v677 = vpack.c.b16 %v673, %v672
  %v683 = vrot.slane %v378, 2
  %685 = vmatprep.subr.bf16.mxu0 0
  %686 = vmatpush1.bf16.msra.mxu0 0
  %687 = vmatprep.subr.bf16.mxu0 0
  %688 = vmatpush1.bf16.msra.mxu0 0
  %689 = vmatprep.subr.bf16.mxu0 0
  %690 = vmatpush1.bf16.msra.mxu0 0
  %691 = vmatprep.subr.bf16.mxu0 0
  %692 = vmatpush1.bf16.msra.mxu0 0
  %693 = vmatprep.subr.bf16.mxu0 0
  %694 = vmatpush1.bf16.msra.mxu0 %v677
  %695 = vmatprep.subr.bf16.mxu0 0
  %696 = vmatpush1.bf16.msra.mxu0 %v676
  %697 = vmatprep.subr.bf16.mxu0 0
  %698 = vmatpush1.bf16.msra.mxu0 %v675
  %699 = vmatprep.subr.bf16.mxu0 0
  %700 = vmatpush1.bf16.msra.mxu0 %v674
  %701 = vmatprep.subr.bf16.mxu0 0
  %702 = vmatpush2.bf16.msra.mxu0 0
  %703 = vmatprep.subr.bf16.mxu0 0
  %704 = vmatpush2.bf16.msra.mxu0 0
  %705 = vmatprep.subr.bf16.mxu0 0
  %706 = vmatpush2.bf16.msra.mxu0 0
  %707 = vmatprep.subr.bf16.mxu0 0
  %708 = vmatpush2.bf16.msra.mxu0 0
  %709 = vmatprep.subr.bf16.mxu0 0
  %710 = vmatpush2.bf16.msra.mxu0 0
  %711 = vmatprep.subr.bf16.mxu0 0
  %712 = vmatpush2.bf16.msra.mxu0 0
  %713 = vmatprep.subr.bf16.mxu0 0
  %714 = vmatpush2.bf16.msra.mxu0 0
  %715 = vmatprep.subr.bf16.mxu0 0
  %716 = vmatpush2.bf16.msra.mxu0 0
  %717 = vmatprep.mubr.bf16.mxu0 0
  %718 = vmatmul.mubr.bf16.gmra.mxu0 %v482
  %v719 = vpop.f32.mrf.mxu0
  %v720 = vadd.f32 %v683, %v719
  %v721 = vpop.f32.mrf.mxu0
  %v722 = vpop.f32.mrf.mxu0
  %v723 = vpop.f32.mrf.mxu0
  %724 = vdwg.mxu0
  %v725 = vxor.u32 %v519, 2147483648
  %v726 = vmul.f32 %v725, 1.442695
  %v727 = vpow.pop %v726
  %v728 = vadd.f32 %v727, 1.0
  %v729 = vrcp.pop %v728
  %v730 = vmul.f32 1.0, %v729
  %v731 = vxor.u32 %v586, 2147483648
  %v732 = vmul.f32 %v731, 1.442695
  %v733 = vpow.pop %v732
  %v734 = vadd.f32 %v733, 1.0
  %v735 = vrcp.pop %v734
  %v736 = vmul.f32 1.0, %v735
  %v737 = vtanh.pop %v653
  %v738 = vxor.u32 %v720, 2147483648
  %v739 = vmul.f32 %v738, 1.442695
  %v740 = vpow.pop %v739
  %v741 = vadd.f32 %v740, 1.0
  %v742 = vrcp.pop %v741
  %v743 = vmul.f32 1.0, %v742
  %v744 = vmul.f32 %v736, %v451
  %v745 = vmul.f32 %v730, %v737
  %v746 = vadd.f32 %v744, %v745
  %v747 = vtanh.pop %v746
  %v748 = vmul.f32 %v743, %v747
  %v749 = vpack.c.bf16 %v748, %v748
  %v750 = vrot.slane %v114, 4
  %v753 = vsel %vm480, %v749, 0
  %755 = vmatprep.subr.bf16.mxu0 0
  %756 = vmatpush1.bf16.msra.mxu0 0
  %757 = vmatprep.subr.bf16.mxu0 0
  %758 = vmatpush1.bf16.msra.mxu0 0
  %759 = vmatprep.subr.bf16.mxu0 0
  %760 = vmatpush1.bf16.msra.mxu0 0
  %761 = vmatprep.subr.bf16.mxu0 0
  %762 = vmatpush1.bf16.msra.mxu0 0
  %763 = vmatprep.subr.bf16.mxu0 0
  %764 = vmatpush1.bf16.msra.mxu0 %v472
  %765 = vmatprep.subr.bf16.mxu0 0
  %766 = vmatpush1.bf16.msra.mxu0 %v471
  %767 = vmatprep.subr.bf16.mxu0 0
  %768 = vmatpush1.bf16.msra.mxu0 %v470
  %769 = vmatprep.subr.bf16.mxu0 0
  %770 = vmatpush1.bf16.msra.mxu0 %v469
  %771 = vmatprep.subr.bf16.mxu0 0
  %772 = vmatpush2.bf16.msra.mxu0 0
  %773 = vmatprep.subr.bf16.mxu0 0
  %774 = vmatpush2.bf16.msra.mxu0 0
  %775 = vmatprep.subr.bf16.mxu0 0
  %776 = vmatpush2.bf16.msra.mxu0 0
  %777 = vmatprep.subr.bf16.mxu0 0
  %778 = vmatpush2.bf16.msra.mxu0 0
  %779 = vmatprep.subr.bf16.mxu0 0
  %780 = vmatpush2.bf16.msra.mxu0 0
  %781 = vmatprep.subr.bf16.mxu0 0
  %782 = vmatpush2.bf16.msra.mxu0 0
  %783 = vmatprep.subr.bf16.mxu0 0
  %784 = vmatpush2.bf16.msra.mxu0 0
  %785 = vmatprep.subr.bf16.mxu0 0
  %786 = vmatpush2.bf16.msra.mxu0 0
  %787 = vmatprep.mubr.bf16.mxu0 0
  %788 = vmatmul.mubr.bf16.gmra.mxu0 %v753
  %v789 = vpop.f32.mrf.mxu0
  %v790 = vadd.f32 %v750, %v789
  %v791 = vpop.f32.mrf.mxu0
  %v792 = vpop.f32.mrf.mxu0
  %v793 = vpop.f32.mrf.mxu0
  %794 = vdwg.mxu0
  %v795 = vrot.slane %v202, 4
  %797 = vmatprep.subr.bf16.mxu0 0
  %798 = vmatpush1.bf16.msra.mxu0 0
  %799 = vmatprep.subr.bf16.mxu0 0
  %800 = vmatpush1.bf16.msra.mxu0 0
  %801 = vmatprep.subr.bf16.mxu0 0
  %802 = vmatpush1.bf16.msra.mxu0 0
  %803 = vmatprep.subr.bf16.mxu0 0
  %804 = vmatpush1.bf16.msra.mxu0 0
  %805 = vmatprep.subr.bf16.mxu0 0
  %806 = vmatpush1.bf16.msra.mxu0 %v543
  %807 = vmatprep.subr.bf16.mxu0 0
  %808 = vmatpush1.bf16.msra.mxu0 %v542
  %809 = vmatprep.subr.bf16.mxu0 0
  %810 = vmatpush1.bf16.msra.mxu0 %v541
  %811 = vmatprep.subr.bf16.mxu0 0
  %812 = vmatpush1.bf16.msra.mxu0 %v540
  %813 = vmatprep.subr.bf16.mxu0 0
  %814 = vmatpush2.bf16.msra.mxu0 0
  %815 = vmatprep.subr.bf16.mxu0 0
  %816 = vmatpush2.bf16.msra.mxu0 0
  %817 = vmatprep.subr.bf16.mxu0 0
  %818 = vmatpush2.bf16.msra.mxu0 0
  %819 = vmatprep.subr.bf16.mxu0 0
  %820 = vmatpush2.bf16.msra.mxu0 0
  %821 = vmatprep.subr.bf16.mxu0 0
  %822 = vmatpush2.bf16.msra.mxu0 0
  %823 = vmatprep.subr.bf16.mxu0 0
  %824 = vmatpush2.bf16.msra.mxu0 0
  %825 = vmatprep.subr.bf16.mxu0 0
  %826 = vmatpush2.bf16.msra.mxu0 0
  %827 = vmatprep.subr.bf16.mxu0 0
  %828 = vmatpush2.bf16.msra.mxu0 0
  %829 = vmatprep.mubr.bf16.mxu0 0
  %830 = vmatmul.mubr.bf16.gmra.mxu0 %v753
  %v831 = vpop.f32.mrf.mxu0
  %v832 = vadd.f32 %v795, %v831
  %v833 = vpop.f32.mrf.mxu0
  %v834 = vpop.f32.mrf.mxu0
  %v835 = vpop.f32.mrf.mxu0
  %836 = vdwg.mxu0
  %v837 = vrot.slane %v290, 4
  %839 = vmatprep.subr.bf16.mxu0 0
  %840 = vmatpush1.bf16.msra.mxu0 0
  %841 = vmatprep.subr.bf16.mxu0 0
  %842 = vmatpush1.bf16.msra.mxu0 0
  %843 = vmatprep.subr.bf16.mxu0 0
  %844 = vmatpush1.bf16.msra.mxu0 0
  %845 = vmatprep.subr.bf16.mxu0 0
  %846 = vmatpush1.bf16.msra.mxu0 0
  %847 = vmatprep.subr.bf16.mxu0 0
  %848 = vmatpush1.bf16.msra.mxu0 %v610
  %849 = vmatprep.subr.bf16.mxu0 0
  %850 = vmatpush1.bf16.msra.mxu0 %v609
  %851 = vmatprep.subr.bf16.mxu0 0
  %852 = vmatpush1.bf16.msra.mxu0 %v608
  %853 = vmatprep.subr.bf16.mxu0 0
  %854 = vmatpush1.bf16.msra.mxu0 %v607
  %855 = vmatprep.subr.bf16.mxu0 0
  %856 = vmatpush2.bf16.msra.mxu0 0
  %857 = vmatprep.subr.bf16.mxu0 0
  %858 = vmatpush2.bf16.msra.mxu0 0
  %859 = vmatprep.subr.bf16.mxu0 0
  %860 = vmatpush2.bf16.msra.mxu0 0
  %861 = vmatprep.subr.bf16.mxu0 0
  %862 = vmatpush2.bf16.msra.mxu0 0
  %863 = vmatprep.subr.bf16.mxu0 0
  %864 = vmatpush2.bf16.msra.mxu0 0
  %865 = vmatprep.subr.bf16.mxu0 0
  %866 = vmatpush2.bf16.msra.mxu0 0
  %867 = vmatprep.subr.bf16.mxu0 0
  %868 = vmatpush2.bf16.msra.mxu0 0
  %869 = vmatprep.subr.bf16.mxu0 0
  %870 = vmatpush2.bf16.msra.mxu0 0
  %871 = vmatprep.mubr.bf16.mxu0 0
  %872 = vmatmul.mubr.bf16.gmra.mxu0 %v753
  %v873 = vpop.f32.mrf.mxu0
  %v874 = vadd.f32 %v837, %v873
  %v875 = vpop.f32.mrf.mxu0
  %v876 = vpop.f32.mrf.mxu0
  %v877 = vpop.f32.mrf.mxu0
  %878 = vdwg.mxu0
  %v879 = vrot.slane %v378, 4
  %881 = vmatprep.subr.bf16.mxu0 0
  %882 = vmatpush1.bf16.msra.mxu0 0
  %883 = vmatprep.subr.bf16.mxu0 0
  %884 = vmatpush1.bf16.msra.mxu0 0
  %885 = vmatprep.subr.bf16.mxu0 0
  %886 = vmatpush1.bf16.msra.mxu0 0
  %887 = vmatprep.subr.bf16.mxu0 0
  %888 = vmatpush1.bf16.msra.mxu0 0
  %889 = vmatprep.subr.bf16.mxu0 0
  %890 = vmatpush1.bf16.msra.mxu0 %v677
  %891 = vmatprep.subr.bf16.mxu0 0
  %892 = vmatpush1.bf16.msra.mxu0 %v676
  %893 = vmatprep.subr.bf16.mxu0 0
  %894 = vmatpush1.bf16.msra.mxu0 %v675
  %895 = vmatprep.subr.bf16.mxu0 0
  %896 = vmatpush1.bf16.msra.mxu0 %v674
  %897 = vmatprep.subr.bf16.mxu0 0
  %898 = vmatpush2.bf16.msra.mxu0 0
  %899 = vmatprep.subr.bf16.mxu0 0
  %900 = vmatpush2.bf16.msra.mxu0 0
  %901 = vmatprep.subr.bf16.mxu0 0
  %902 = vmatpush2.bf16.msra.mxu0 0
  %903 = vmatprep.subr.bf16.mxu0 0
  %904 = vmatpush2.bf16.msra.mxu0 0
  %905 = vmatprep.subr.bf16.mxu0 0
  %906 = vmatpush2.bf16.msra.mxu0 0
  %907 = vmatprep.subr.bf16.mxu0 0
  %908 = vmatpush2.bf16.msra.mxu0 0
  %909 = vmatprep.subr.bf16.mxu0 0
  %910 = vmatpush2.bf16.msra.mxu0 0
  %911 = vmatprep.subr.bf16.mxu0 0
  %912 = vmatpush2.bf16.msra.mxu0 0
  %913 = vmatprep.mubr.bf16.mxu0 0
  %914 = vmatmul.mubr.bf16.gmra.mxu0 %v753
  %v915 = vpop.f32.mrf.mxu0
  %v916 = vadd.f32 %v879, %v915
  %v917 = vpop.f32.mrf.mxu0
  %v918 = vpop.f32.mrf.mxu0
  %v919 = vpop.f32.mrf.mxu0
  %920 = vdwg.mxu0
  %v921 = vxor.u32 %v790, 2147483648
  %v922 = vmul.f32 %v921, 1.442695
  %v923 = vpow.pop %v922
  %v924 = vadd.f32 %v923, 1.0
  %v925 = vrcp.pop %v924
  %v926 = vmul.f32 1.0, %v925
  %v927 = vxor.u32 %v832, 2147483648
  %v928 = vmul.f32 %v927, 1.442695
  %v929 = vpow.pop %v928
  %v930 = vadd.f32 %v929, 1.0
  %v931 = vrcp.pop %v930
  %v932 = vmul.f32 1.0, %v931
  %v933 = vtanh.pop %v874
  %v934 = vxor.u32 %v916, 2147483648
  %v935 = vmul.f32 %v934, 1.442695
  %v936 = vpow.pop %v935
  %v937 = vadd.f32 %v936, 1.0
  %v938 = vrcp.pop %v937
  %v939 = vmul.f32 1.0, %v938
  %v940 = vmul.f32 %v932, %v746
  %v941 = vmul.f32 %v926, %v933
  %v942 = vadd.f32 %v940, %v941
  %v943 = vtanh.pop %v942
  %v944 = vmul.f32 %v939, %v943
  %v945 = vpack.c.bf16 %v944, %v944
  %v946 = vrot.slane %v114, 6
  %v949 = vsel %vm480, %v945, 0
  %951 = vmatprep.subr.bf16.mxu0 0
  %952 = vmatpush1.bf16.msra.mxu0 0
  %953 = vmatprep.subr.bf16.mxu0 0
  %954 = vmatpush1.bf16.msra.mxu0 0
  %955 = vmatprep.subr.bf16.mxu0 0
  %956 = vmatpush1.bf16.msra.mxu0 0
  %957 = vmatprep.subr.bf16.mxu0 0
  %958 = vmatpush1.bf16.msra.mxu0 0
  %959 = vmatprep.subr.bf16.mxu0 0
  %960 = vmatpush1.bf16.msra.mxu0 %v472
  %961 = vmatprep.subr.bf16.mxu0 0
  %962 = vmatpush1.bf16.msra.mxu0 %v471
  %963 = vmatprep.subr.bf16.mxu0 0
  %964 = vmatpush1.bf16.msra.mxu0 %v470
  %965 = vmatprep.subr.bf16.mxu0 0
  %966 = vmatpush1.bf16.msra.mxu0 %v469
  %967 = vmatprep.subr.bf16.mxu0 0
  %968 = vmatpush2.bf16.msra.mxu0 0
  %969 = vmatprep.subr.bf16.mxu0 0
  %970 = vmatpush2.bf16.msra.mxu0 0
  %971 = vmatprep.subr.bf16.mxu0 0
  %972 = vmatpush2.bf16.msra.mxu0 0
  %973 = vmatprep.subr.bf16.mxu0 0
  %974 = vmatpush2.bf16.msra.mxu0 0
  %975 = vmatprep.subr.bf16.mxu0 0
  %976 = vmatpush2.bf16.msra.mxu0 0
  %977 = vmatprep.subr.bf16.mxu0 0
  %978 = vmatpush2.bf16.msra.mxu0 0
  %979 = vmatprep.subr.bf16.mxu0 0
  %980 = vmatpush2.bf16.msra.mxu0 0
  %981 = vmatprep.subr.bf16.mxu0 0
  %982 = vmatpush2.bf16.msra.mxu0 0
  %983 = vmatprep.mubr.bf16.mxu0 0
  %984 = vmatmul.mubr.bf16.gmra.mxu0 %v949
  %v985 = vpop.f32.mrf.mxu0
  %v986 = vadd.f32 %v946, %v985
  %v987 = vpop.f32.mrf.mxu0
  %v988 = vpop.f32.mrf.mxu0
  %v989 = vpop.f32.mrf.mxu0
  %990 = vdwg.mxu0
  %v991 = vrot.slane %v202, 6
  %993 = vmatprep.subr.bf16.mxu0 0
  %994 = vmatpush1.bf16.msra.mxu0 0
  %995 = vmatprep.subr.bf16.mxu0 0
  %996 = vmatpush1.bf16.msra.mxu0 0
  %997 = vmatprep.subr.bf16.mxu0 0
  %998 = vmatpush1.bf16.msra.mxu0 0
  %999 = vmatprep.subr.bf16.mxu0 0
  %1000 = vmatpush1.bf16.msra.mxu0 0
  %1001 = vmatprep.subr.bf16.mxu0 0
  %1002 = vmatpush1.bf16.msra.mxu0 %v543
  %1003 = vmatprep.subr.bf16.mxu0 0
  %1004 = vmatpush1.bf16.msra.mxu0 %v542
  %1005 = vmatprep.subr.bf16.mxu0 0
  %1006 = vmatpush1.bf16.msra.mxu0 %v541
  %1007 = vmatprep.subr.bf16.mxu0 0
  %1008 = vmatpush1.bf16.msra.mxu0 %v540
  %1009 = vmatprep.subr.bf16.mxu0 0
  %1010 = vmatpush2.bf16.msra.mxu0 0
  %1011 = vmatprep.subr.bf16.mxu0 0
  %1012 = vmatpush2.bf16.msra.mxu0 0
  %1013 = vmatprep.subr.bf16.mxu0 0
  %1014 = vmatpush2.bf16.msra.mxu0 0
  %1015 = vmatprep.subr.bf16.mxu0 0
  %1016 = vmatpush2.bf16.msra.mxu0 0
  %1017 = vmatprep.subr.bf16.mxu0 0
  %1018 = vmatpush2.bf16.msra.mxu0 0
  %1019 = vmatprep.subr.bf16.mxu0 0
  %1020 = vmatpush2.bf16.msra.mxu0 0
  %1021 = vmatprep.subr.bf16.mxu0 0
  %1022 = vmatpush2.bf16.msra.mxu0 0
  %1023 = vmatprep.subr.bf16.mxu0 0
  %1024 = vmatpush2.bf16.msra.mxu0 0
  %1025 = vmatprep.mubr.bf16.mxu0 0
  %1026 = vmatmul.mubr.bf16.gmra.mxu0 %v949
  %v1027 = vpop.f32.mrf.mxu0
  %v1028 = vadd.f32 %v991, %v1027
  %v1029 = vpop.f32.mrf.mxu0
  %v1030 = vpop.f32.mrf.mxu0
  %v1031 = vpop.f32.mrf.mxu0
  %1032 = vdwg.mxu0
  %v1033 = vrot.slane %v290, 6
  %1035 = vmatprep.subr.bf16.mxu0 0
  %1036 = vmatpush1.bf16.msra.mxu0 0
  %1037 = vmatprep.subr.bf16.mxu0 0
  %1038 = vmatpush1.bf16.msra.mxu0 0
  %1039 = vmatprep.subr.bf16.mxu0 0
  %1040 = vmatpush1.bf16.msra.mxu0 0
  %1041 = vmatprep.subr.bf16.mxu0 0
  %1042 = vmatpush1.bf16.msra.mxu0 0
  %1043 = vmatprep.subr.bf16.mxu0 0
  %1044 = vmatpush1.bf16.msra.mxu0 %v610
  %1045 = vmatprep.subr.bf16.mxu0 0
  %1046 = vmatpush1.bf16.msra.mxu0 %v609
  %1047 = vmatprep.subr.bf16.mxu0 0
  %1048 = vmatpush1.bf16.msra.mxu0 %v608
  %1049 = vmatprep.subr.bf16.mxu0 0
  %1050 = vmatpush1.bf16.msra.mxu0 %v607
  %1051 = vmatprep.subr.bf16.mxu0 0
  %1052 = vmatpush2.bf16.msra.mxu0 0
  %1053 = vmatprep.subr.bf16.mxu0 0
  %1054 = vmatpush2.bf16.msra.mxu0 0
  %1055 = vmatprep.subr.bf16.mxu0 0
  %1056 = vmatpush2.bf16.msra.mxu0 0
  %1057 = vmatprep.subr.bf16.mxu0 0
  %1058 = vmatpush2.bf16.msra.mxu0 0
  %1059 = vmatprep.subr.bf16.mxu0 0
  %1060 = vmatpush2.bf16.msra.mxu0 0
  %1061 = vmatprep.subr.bf16.mxu0 0
  %1062 = vmatpush2.bf16.msra.mxu0 0
  %1063 = vmatprep.subr.bf16.mxu0 0
  %1064 = vmatpush2.bf16.msra.mxu0 0
  %1065 = vmatprep.subr.bf16.mxu0 0
  %1066 = vmatpush2.bf16.msra.mxu0 0
  %1067 = vmatprep.mubr.bf16.mxu0 0
  %1068 = vmatmul.mubr.bf16.gmra.mxu0 %v949
  %v1069 = vpop.f32.mrf.mxu0
  %v1070 = vadd.f32 %v1033, %v1069
  %v1071 = vpop.f32.mrf.mxu0
  %v1072 = vpop.f32.mrf.mxu0
  %v1073 = vpop.f32.mrf.mxu0
  %1074 = vdwg.mxu0
  %v1075 = vrot.slane %v378, 6
  %1077 = vmatprep.subr.bf16.mxu0 0
  %1078 = vmatpush1.bf16.msra.mxu0 0
  %1079 = vmatprep.subr.bf16.mxu0 0
  %1080 = vmatpush1.bf16.msra.mxu0 0
  %1081 = vmatprep.subr.bf16.mxu0 0
  %1082 = vmatpush1.bf16.msra.mxu0 0
  %1083 = vmatprep.subr.bf16.mxu0 0
  %1084 = vmatpush1.bf16.msra.mxu0 0
  %1085 = vmatprep.subr.bf16.mxu0 0
  %1086 = vmatpush1.bf16.msra.mxu0 %v677
  %1087 = vmatprep.subr.bf16.mxu0 0
  %1088 = vmatpush1.bf16.msra.mxu0 %v676
  %1089 = vmatprep.subr.bf16.mxu0 0
  %1090 = vmatpush1.bf16.msra.mxu0 %v675
  %1091 = vmatprep.subr.bf16.mxu0 0
  %1092 = vmatpush1.bf16.msra.mxu0 %v674
  %1093 = vmatprep.subr.bf16.mxu0 0
  %1094 = vmatpush2.bf16.msra.mxu0 0
  %1095 = vmatprep.subr.bf16.mxu0 0
  %1096 = vmatpush2.bf16.msra.mxu0 0
  %1097 = vmatprep.subr.bf16.mxu0 0
  %1098 = vmatpush2.bf16.msra.mxu0 0
  %1099 = vmatprep.subr.bf16.mxu0 0
  %1100 = vmatpush2.bf16.msra.mxu0 0
  %1101 = vmatprep.subr.bf16.mxu0 0
  %1102 = vmatpush2.bf16.msra.mxu0 0
  %1103 = vmatprep.subr.bf16.mxu0 0
  %1104 = vmatpush2.bf16.msra.mxu0 0
  %1105 = vmatprep.subr.bf16.mxu0 0
  %1106 = vmatpush2.bf16.msra.mxu0 0
  %1107 = vmatprep.subr.bf16.mxu0 0
  %1108 = vmatpush2.bf16.msra.mxu0 0
  %1109 = vmatprep.mubr.bf16.mxu0 0
  %1110 = vmatmul.mubr.bf16.gmra.mxu0 %v949
  %v1111 = vpop.f32.mrf.mxu0
  %v1112 = vadd.f32 %v1075, %v1111
  %v1113 = vpop.f32.mrf.mxu0
  %v1114 = vpop.f32.mrf.mxu0
  %v1115 = vpop.f32.mrf.mxu0
  %1116 = vdwg.mxu0
  %v1117 = vxor.u32 %v986, 2147483648
  %v1118 = vmul.f32 %v1117, 1.442695
  %v1119 = vpow.pop %v1118
  %v1120 = vadd.f32 %v1119, 1.0
  %v1121 = vrcp.pop %v1120
  %v1122 = vmul.f32 1.0, %v1121
  %v1123 = vxor.u32 %v1028, 2147483648
  %v1124 = vmul.f32 %v1123, 1.442695
  %v1125 = vpow.pop %v1124
  %v1126 = vadd.f32 %v1125, 1.0
  %v1127 = vrcp.pop %v1126
  %v1128 = vmul.f32 1.0, %v1127
  %v1129 = vtanh.pop %v1070
  %v1130 = vxor.u32 %v1112, 2147483648
  %v1131 = vmul.f32 %v1130, 1.442695
  %v1132 = vpow.pop %v1131
  %v1133 = vadd.f32 %v1132, 1.0
  %v1134 = vrcp.pop %v1133
  %v1135 = vmul.f32 1.0, %v1134
  %v1136 = vmul.f32 %v1128, %v942
  %v1137 = vmul.f32 %v1122, %v1129
  %v1138 = vadd.f32 %v1136, %v1137
  %v1139 = vtanh.pop %v1138
  %v1140 = vmul.f32 %v1135, %v1139
  %v1141 = vpack.c.bf16 %v1140, %v1140
  %v1143 = vsel %vm480, %v1141, 0
  %1145 = vmatprep.subr.bf16.mxu0 0
  %1146 = vmatpush1.bf16.msra.mxu0 0
  %1147 = vmatprep.subr.bf16.mxu0 0
  %1148 = vmatpush1.bf16.msra.mxu0 0
  %1149 = vmatprep.subr.bf16.mxu0 0
  %1150 = vmatpush1.bf16.msra.mxu0 0
  %1151 = vmatprep.subr.bf16.mxu0 0
  %1152 = vmatpush1.bf16.msra.mxu0 0
  %1153 = vmatprep.subr.bf16.mxu0 0
  %1154 = vmatpush1.bf16.msra.mxu0 %v472
  %1155 = vmatprep.subr.bf16.mxu0 0
  %1156 = vmatpush1.bf16.msra.mxu0 %v471
  %1157 = vmatprep.subr.bf16.mxu0 0
  %1158 = vmatpush1.bf16.msra.mxu0 %v470
  %1159 = vmatprep.subr.bf16.mxu0 0
  %1160 = vmatpush1.bf16.msra.mxu0 %v469
  %1161 = vmatprep.subr.bf16.mxu0 0
  %1162 = vmatpush2.bf16.msra.mxu0 0
  %1163 = vmatprep.subr.bf16.mxu0 0
  %1164 = vmatpush2.bf16.msra.mxu0 0
  %1165 = vmatprep.subr.bf16.mxu0 0
  %1166 = vmatpush2.bf16.msra.mxu0 0
  %1167 = vmatprep.subr.bf16.mxu0 0
  %1168 = vmatpush2.bf16.msra.mxu0 0
  %1169 = vmatprep.subr.bf16.mxu0 0
  %1170 = vmatpush2.bf16.msra.mxu0 0
  %1171 = vmatprep.subr.bf16.mxu0 0
  %1172 = vmatpush2.bf16.msra.mxu0 0
  %1173 = vmatprep.subr.bf16.mxu0 0
  %1174 = vmatpush2.bf16.msra.mxu0 0
  %1175 = vmatprep.subr.bf16.mxu0 0
  %1176 = vmatpush2.bf16.msra.mxu0 0
  %1177 = vmatprep.mubr.bf16.mxu0 0
  %1178 = vmatmul.mubr.bf16.gmra.mxu0 %v1143
  %v1179 = vpop.f32.mrf.mxu0
  %v1180 = vadd.f32 %v119, %v1179
  %v1181 = vpop.f32.mrf.mxu0
  %v1182 = vpop.f32.mrf.mxu0
  %v1183 = vpop.f32.mrf.mxu0
  %1184 = vdwg.mxu0
  %1185 = vmatprep.subr.bf16.mxu0 0
  %1186 = vmatpush1.bf16.msra.mxu0 0
  %1187 = vmatprep.subr.bf16.mxu0 0
  %1188 = vmatpush1.bf16.msra.mxu0 0
  %1189 = vmatprep.subr.bf16.mxu0 0
  %1190 = vmatpush1.bf16.msra.mxu0 0
  %1191 = vmatprep.subr.bf16.mxu0 0
  %1192 = vmatpush1.bf16.msra.mxu0 0
  %1193 = vmatprep.subr.bf16.mxu0 0
  %1194 = vmatpush1.bf16.msra.mxu0 %v543
  %1195 = vmatprep.subr.bf16.mxu0 0
  %1196 = vmatpush1.bf16.msra.mxu0 %v542
  %1197 = vmatprep.subr.bf16.mxu0 0
  %1198 = vmatpush1.bf16.msra.mxu0 %v541
  %1199 = vmatprep.subr.bf16.mxu0 0
  %1200 = vmatpush1.bf16.msra.mxu0 %v540
  %1201 = vmatprep.subr.bf16.mxu0 0
  %1202 = vmatpush2.bf16.msra.mxu0 0
  %1203 = vmatprep.subr.bf16.mxu0 0
  %1204 = vmatpush2.bf16.msra.mxu0 0
  %1205 = vmatprep.subr.bf16.mxu0 0
  %1206 = vmatpush2.bf16.msra.mxu0 0
  %1207 = vmatprep.subr.bf16.mxu0 0
  %1208 = vmatpush2.bf16.msra.mxu0 0
  %1209 = vmatprep.subr.bf16.mxu0 0
  %1210 = vmatpush2.bf16.msra.mxu0 0
  %1211 = vmatprep.subr.bf16.mxu0 0
  %1212 = vmatpush2.bf16.msra.mxu0 0
  %1213 = vmatprep.subr.bf16.mxu0 0
  %1214 = vmatpush2.bf16.msra.mxu0 0
  %1215 = vmatprep.subr.bf16.mxu0 0
  %1216 = vmatpush2.bf16.msra.mxu0 0
  %1217 = vmatprep.mubr.bf16.mxu0 0
  %1218 = vmatmul.mubr.bf16.gmra.mxu0 %v1143
  %v1219 = vpop.f32.mrf.mxu0
  %v1220 = vadd.f32 %v207, %v1219
  %v1221 = vpop.f32.mrf.mxu0
  %v1222 = vpop.f32.mrf.mxu0
  %v1223 = vpop.f32.mrf.mxu0
  %1224 = vdwg.mxu0
  %1225 = vmatprep.subr.bf16.mxu0 0
  %1226 = vmatpush1.bf16.msra.mxu0 0
  %1227 = vmatprep.subr.bf16.mxu0 0
  %1228 = vmatpush1.bf16.msra.mxu0 0
  %1229 = vmatprep.subr.bf16.mxu0 0
  %1230 = vmatpush1.bf16.msra.mxu0 0
  %1231 = vmatprep.subr.bf16.mxu0 0
  %1232 = vmatpush1.bf16.msra.mxu0 0
  %1233 = vmatprep.subr.bf16.mxu0 0
  %1234 = vmatpush1.bf16.msra.mxu0 %v610
  %1235 = vmatprep.subr.bf16.mxu0 0
  %1236 = vmatpush1.bf16.msra.mxu0 %v609
  %1237 = vmatprep.subr.bf16.mxu0 0
  %1238 = vmatpush1.bf16.msra.mxu0 %v608
  %1239 = vmatprep.subr.bf16.mxu0 0
  %1240 = vmatpush1.bf16.msra.mxu0 %v607
  %1241 = vmatprep.subr.bf16.mxu0 0
  %1242 = vmatpush2.bf16.msra.mxu0 0
  %1243 = vmatprep.subr.bf16.mxu0 0
  %1244 = vmatpush2.bf16.msra.mxu0 0
  %1245 = vmatprep.subr.bf16.mxu0 0
  %1246 = vmatpush2.bf16.msra.mxu0 0
  %1247 = vmatprep.subr.bf16.mxu0 0
  %1248 = vmatpush2.bf16.msra.mxu0 0
  %1249 = vmatprep.subr.bf16.mxu0 0
  %1250 = vmatpush2.bf16.msra.mxu0 0
  %1251 = vmatprep.subr.bf16.mxu0 0
  %1252 = vmatpush2.bf16.msra.mxu0 0
  %1253 = vmatprep.subr.bf16.mxu0 0
  %1254 = vmatpush2.bf16.msra.mxu0 0
  %1255 = vmatprep.subr.bf16.mxu0 0
  %1256 = vmatpush2.bf16.msra.mxu0 0
  %1257 = vmatprep.mubr.bf16.mxu0 0
  %1258 = vmatmul.mubr.bf16.gmra.mxu0 %v1143
  %v1259 = vpop.f32.mrf.mxu0
  %v1260 = vadd.f32 %v295, %v1259
  %v1261 = vpop.f32.mrf.mxu0
  %v1262 = vpop.f32.mrf.mxu0
  %v1263 = vpop.f32.mrf.mxu0
  %1264 = vdwg.mxu0
  %1265 = vmatprep.subr.bf16.mxu0 0
  %1266 = vmatpush1.bf16.msra.mxu0 0
  %1267 = vmatprep.subr.bf16.mxu0 0
  %1268 = vmatpush1.bf16.msra.mxu0 0
  %1269 = vmatprep.subr.bf16.mxu0 0
  %1270 = vmatpush1.bf16.msra.mxu0 0
  %1271 = vmatprep.subr.bf16.mxu0 0
  %1272 = vmatpush1.bf16.msra.mxu0 0
  %1273 = vmatprep.subr.bf16.mxu0 0
  %1274 = vmatpush1.bf16.msra.mxu0 %v677
  %1275 = vmatprep.subr.bf16.mxu0 0
  %1276 = vmatpush1.bf16.msra.mxu0 %v676
  %1277 = vmatprep.subr.bf16.mxu0 0
  %1278 = vmatpush1.bf16.msra.mxu0 %v675
  %1279 = vmatprep.subr.bf16.mxu0 0
  %1280 = vmatpush1.bf16.msra.mxu0 %v674
  %1281 = vmatprep.subr.bf16.mxu0 0
  %1282 = vmatpush2.bf16.msra.mxu0 0
  %1283 = vmatprep.subr.bf16.mxu0 0
  %1284 = vmatpush2.bf16.msra.mxu0 0
  %1285 = vmatprep.subr.bf16.mxu0 0
  %1286 = vmatpush2.bf16.msra.mxu0 0
  %1287 = vmatprep.subr.bf16.mxu0 0
  %1288 = vmatpush2.bf16.msra.mxu0 0
  %1289 = vmatprep.subr.bf16.mxu0 0
  %1290 = vmatpush2.bf16.msra.mxu0 0
  %1291 = vmatprep.subr.bf16.mxu0 0
  %1292 = vmatpush2.bf16.msra.mxu0 0
  %1293 = vmatprep.subr.bf16.mxu0 0
  %1294 = vmatpush2.bf16.msra.mxu0 0
  %1295 = vmatprep.subr.bf16.mxu0 0
  %1296 = vmatpush2.bf16.msra.mxu0 0
  %1297 = vmatprep.mubr.bf16.mxu0 0
  %1298 = vmatmul.mubr.bf16.gmra.mxu0 %v1143
  %v1299 = vpop.f32.mrf.mxu0
  %v1300 = vadd.f32 %v383, %v1299
  %v1301 = vpop.f32.mrf.mxu0
  %v1302 = vpop.f32.mrf.mxu0
  %v1303 = vpop.f32.mrf.mxu0
  %1304 = vdwg.mxu0
  %v1305 = vxor.u32 %v1180, 2147483648
  %v1306 = vmul.f32 %v1305, 1.442695
  %v1307 = vpow.pop %v1306
  %v1308 = vadd.f32 %v1307, 1.0
  %v1309 = vrcp.pop %v1308
  %v1310 = vmul.f32 1.0, %v1309
  %v1311 = vxor.u32 %v1220, 2147483648
  %v1312 = vmul.f32 %v1311, 1.442695
  %v1313 = vpow.pop %v1312
  %v1314 = vadd.f32 %v1313, 1.0
  %v1315 = vrcp.pop %v1314
  %v1316 = vmul.f32 1.0, %v1315
  %v1317 = vtanh.pop %v1260
  %v1318 = vxor.u32 %v1300, 2147483648
  %v1319 = vmul.f32 %v1318, 1.442695
  %v1320 = vpow.pop %v1319
  %v1321 = vadd.f32 %v1320, 1.0
  %v1322 = vrcp.pop %v1321
  %v1323 = vmul.f32 1.0, %v1322
  %v1324 = vmul.f32 %v1316, %v1138
  %v1325 = vmul.f32 %v1310, %v1317
  %v1326 = vadd.f32 %v1324, %v1325
  %v1327 = vtanh.pop %v1326
  %v1328 = vmul.f32 %v1323, %v1327
  %v1329 = vpack.c.bf16 %v1328, %v1328
  %v1331 = vrot.slane %v119, 2
  %v1334 = vsel %vm480, %v1329, 0
  %1336 = vmatprep.subr.bf16.mxu0 0
  %1337 = vmatpush1.bf16.msra.mxu0 0
  %1338 = vmatprep.subr.bf16.mxu0 0
  %1339 = vmatpush1.bf16.msra.mxu0 0
  %1340 = vmatprep.subr.bf16.mxu0 0
  %1341 = vmatpush1.bf16.msra.mxu0 0
  %1342 = vmatprep.subr.bf16.mxu0 0
  %1343 = vmatpush1.bf16.msra.mxu0 0
  %1344 = vmatprep.subr.bf16.mxu0 0
  %1345 = vmatpush1.bf16.msra.mxu0 %v472
  %1346 = vmatprep.subr.bf16.mxu0 0
  %1347 = vmatpush1.bf16.msra.mxu0 %v471
  %1348 = vmatprep.subr.bf16.mxu0 0
  %1349 = vmatpush1.bf16.msra.mxu0 %v470
  %1350 = vmatprep.subr.bf16.mxu0 0
  %1351 = vmatpush1.bf16.msra.mxu0 %v469
  %1352 = vmatprep.subr.bf16.mxu0 0
  %1353 = vmatpush2.bf16.msra.mxu0 0
  %1354 = vmatprep.subr.bf16.mxu0 0
  %1355 = vmatpush2.bf16.msra.mxu0 0
  %1356 = vmatprep.subr.bf16.mxu0 0
  %1357 = vmatpush2.bf16.msra.mxu0 0
  %1358 = vmatprep.subr.bf16.mxu0 0
  %1359 = vmatpush2.bf16.msra.mxu0 0
  %1360 = vmatprep.subr.bf16.mxu0 0
  %1361 = vmatpush2.bf16.msra.mxu0 0
  %1362 = vmatprep.subr.bf16.mxu0 0
  %1363 = vmatpush2.bf16.msra.mxu0 0
  %1364 = vmatprep.subr.bf16.mxu0 0
  %1365 = vmatpush2.bf16.msra.mxu0 0
  %1366 = vmatprep.subr.bf16.mxu0 0
  %1367 = vmatpush2.bf16.msra.mxu0 0
  %1368 = vmatprep.mubr.bf16.mxu0 0
  %1369 = vmatmul.mubr.bf16.gmra.mxu0 %v1334
  %v1370 = vpop.f32.mrf.mxu0
  %v1371 = vadd.f32 %v1331, %v1370
  %v1372 = vpop.f32.mrf.mxu0
  %v1373 = vpop.f32.mrf.mxu0
  %v1374 = vpop.f32.mrf.mxu0
  %1375 = vdwg.mxu0
  %v1377 = vrot.slane %v207, 2
  %1379 = vmatprep.subr.bf16.mxu0 0
  %1380 = vmatpush1.bf16.msra.mxu0 0
  %1381 = vmatprep.subr.bf16.mxu0 0
  %1382 = vmatpush1.bf16.msra.mxu0 0
  %1383 = vmatprep.subr.bf16.mxu0 0
  %1384 = vmatpush1.bf16.msra.mxu0 0
  %1385 = vmatprep.subr.bf16.mxu0 0
  %1386 = vmatpush1.bf16.msra.mxu0 0
  %1387 = vmatprep.subr.bf16.mxu0 0
  %1388 = vmatpush1.bf16.msra.mxu0 %v543
  %1389 = vmatprep.subr.bf16.mxu0 0
  %1390 = vmatpush1.bf16.msra.mxu0 %v542
  %1391 = vmatprep.subr.bf16.mxu0 0
  %1392 = vmatpush1.bf16.msra.mxu0 %v541
  %1393 = vmatprep.subr.bf16.mxu0 0
  %1394 = vmatpush1.bf16.msra.mxu0 %v540
  %1395 = vmatprep.subr.bf16.mxu0 0
  %1396 = vmatpush2.bf16.msra.mxu0 0
  %1397 = vmatprep.subr.bf16.mxu0 0
  %1398 = vmatpush2.bf16.msra.mxu0 0
  %1399 = vmatprep.subr.bf16.mxu0 0
  %1400 = vmatpush2.bf16.msra.mxu0 0
  %1401 = vmatprep.subr.bf16.mxu0 0
  %1402 = vmatpush2.bf16.msra.mxu0 0
  %1403 = vmatprep.subr.bf16.mxu0 0
  %1404 = vmatpush2.bf16.msra.mxu0 0
  %1405 = vmatprep.subr.bf16.mxu0 0
  %1406 = vmatpush2.bf16.msra.mxu0 0
  %1407 = vmatprep.subr.bf16.mxu0 0
  %1408 = vmatpush2.bf16.msra.mxu0 0
  %1409 = vmatprep.subr.bf16.mxu0 0
  %1410 = vmatpush2.bf16.msra.mxu0 0
  %1411 = vmatprep.mubr.bf16.mxu0 0
  %1412 = vmatmul.mubr.bf16.gmra.mxu0 %v1334
  %v1413 = vpop.f32.mrf.mxu0
  %v1414 = vadd.f32 %v1377, %v1413
  %v1415 = vpop.f32.mrf.mxu0
  %v1416 = vpop.f32.mrf.mxu0
  %v1417 = vpop.f32.mrf.mxu0
  %1418 = vdwg.mxu0
  %v1420 = vrot.slane %v295, 2
  %1422 = vmatprep.subr.bf16.mxu0 0
  %1423 = vmatpush1.bf16.msra.mxu0 0
  %1424 = vmatprep.subr.bf16.mxu0 0
  %1425 = vmatpush1.bf16.msra.mxu0 0
  %1426 = vmatprep.subr.bf16.mxu0 0
  %1427 = vmatpush1.bf16.msra.mxu0 0
  %1428 = vmatprep.subr.bf16.mxu0 0
  %1429 = vmatpush1.bf16.msra.mxu0 0
  %1430 = vmatprep.subr.bf16.mxu0 0
  %1431 = vmatpush1.bf16.msra.mxu0 %v610
  %1432 = vmatprep.subr.bf16.mxu0 0
  %1433 = vmatpush1.bf16.msra.mxu0 %v609
  %1434 = vmatprep.subr.bf16.mxu0 0
  %1435 = vmatpush1.bf16.msra.mxu0 %v608
  %1436 = vmatprep.subr.bf16.mxu0 0
  %1437 = vmatpush1.bf16.msra.mxu0 %v607
  %1438 = vmatprep.subr.bf16.mxu0 0
  %1439 = vmatpush2.bf16.msra.mxu0 0
  %1440 = vmatprep.subr.bf16.mxu0 0
  %1441 = vmatpush2.bf16.msra.mxu0 0
  %1442 = vmatprep.subr.bf16.mxu0 0
  %1443 = vmatpush2.bf16.msra.mxu0 0
  %1444 = vmatprep.subr.bf16.mxu0 0
  %1445 = vmatpush2.bf16.msra.mxu0 0
  %1446 = vmatprep.subr.bf16.mxu0 0
  %1447 = vmatpush2.bf16.msra.mxu0 0
  %1448 = vmatprep.subr.bf16.mxu0 0
  %1449 = vmatpush2.bf16.msra.mxu0 0
  %1450 = vmatprep.subr.bf16.mxu0 0
  %1451 = vmatpush2.bf16.msra.mxu0 0
  %1452 = vmatprep.subr.bf16.mxu0 0
  %1453 = vmatpush2.bf16.msra.mxu0 0
  %1454 = vmatprep.mubr.bf16.mxu0 0
  %1455 = vmatmul.mubr.bf16.gmra.mxu0 %v1334
  %v1456 = vpop.f32.mrf.mxu0
  %v1457 = vadd.f32 %v1420, %v1456
  %v1458 = vpop.f32.mrf.mxu0
  %v1459 = vpop.f32.mrf.mxu0
  %v1460 = vpop.f32.mrf.mxu0
  %1461 = vdwg.mxu0
  %v1463 = vrot.slane %v383, 2
  %1465 = vmatprep.subr.bf16.mxu0 0
  %1466 = vmatpush1.bf16.msra.mxu0 0
  %1467 = vmatprep.subr.bf16.mxu0 0
  %1468 = vmatpush1.bf16.msra.mxu0 0
  %1469 = vmatprep.subr.bf16.mxu0 0
  %1470 = vmatpush1.bf16.msra.mxu0 0
  %1471 = vmatprep.subr.bf16.mxu0 0
  %1472 = vmatpush1.bf16.msra.mxu0 0
  %1473 = vmatprep.subr.bf16.mxu0 0
  %1474 = vmatpush1.bf16.msra.mxu0 %v677
  %1475 = vmatprep.subr.bf16.mxu0 0
  %1476 = vmatpush1.bf16.msra.mxu0 %v676
  %1477 = vmatprep.subr.bf16.mxu0 0
  %1478 = vmatpush1.bf16.msra.mxu0 %v675
  %1479 = vmatprep.subr.bf16.mxu0 0
  %1480 = vmatpush1.bf16.msra.mxu0 %v674
  %1481 = vmatprep.subr.bf16.mxu0 0
  %1482 = vmatpush2.bf16.msra.mxu0 0
  %1483 = vmatprep.subr.bf16.mxu0 0
  %1484 = vmatpush2.bf16.msra.mxu0 0
  %1485 = vmatprep.subr.bf16.mxu0 0
  %1486 = vmatpush2.bf16.msra.mxu0 0
  %1487 = vmatprep.subr.bf16.mxu0 0
  %1488 = vmatpush2.bf16.msra.mxu0 0
  %1489 = vmatprep.subr.bf16.mxu0 0
  %1490 = vmatpush2.bf16.msra.mxu0 0
  %1491 = vmatprep.subr.bf16.mxu0 0
  %1492 = vmatpush2.bf16.msra.mxu0 0
  %1493 = vmatprep.subr.bf16.mxu0 0
  %1494 = vmatpush2.bf16.msra.mxu0 0
  %1495 = vmatprep.subr.bf16.mxu0 0
  %1496 = vmatpush2.bf16.msra.mxu0 0
  %1497 = vmatprep.mubr.bf16.mxu0 0
  %1498 = vmatmul.mubr.bf16.gmra.mxu0 %v1334
  %v1499 = vpop.f32.mrf.mxu0
  %v1500 = vadd.f32 %v1463, %v1499
  %v1501 = vpop.f32.mrf.mxu0
  %v1502 = vpop.f32.mrf.mxu0
  %v1503 = vpop.f32.mrf.mxu0
  %1504 = vdwg.mxu0
  %v1505 = vxor.u32 %v1371, 2147483648
  %v1506 = vmul.f32 %v1505, 1.442695
  %v1507 = vpow.pop %v1506
  %v1508 = vadd.f32 %v1507, 1.0
  %v1509 = vrcp.pop %v1508
  %v1510 = vmul.f32 1.0, %v1509
  %v1511 = vxor.u32 %v1414, 2147483648
  %v1512 = vmul.f32 %v1511, 1.442695
  %v1513 = vpow.pop %v1512
  %v1514 = vadd.f32 %v1513, 1.0
  %v1515 = vrcp.pop %v1514
  %v1516 = vmul.f32 1.0, %v1515
  %v1517 = vtanh.pop %v1457
  %v1518 = vxor.u32 %v1500, 2147483648
  %v1519 = vmul.f32 %v1518, 1.442695
  %v1520 = vpow.pop %v1519
  %v1521 = vadd.f32 %v1520, 1.0
  %v1522 = vrcp.pop %v1521
  %v1523 = vmul.f32 1.0, %v1522
  %v1524 = vmul.f32 %v1516, %v1326
  %v1525 = vmul.f32 %v1510, %v1517
  %v1526 = vadd.f32 %v1524, %v1525
  %v1527 = vtanh.pop %v1526
  %v1528 = vmul.f32 %v1523, %v1527
  %v1529 = vpack.c.bf16 %v1528, %v1528
  %v1530 = vrot.slane %v119, 4
  %v1533 = vsel %vm480, %v1529, 0
  %1535 = vmatprep.subr.bf16.mxu0 0
  %1536 = vmatpush1.bf16.msra.mxu0 0
  %1537 = vmatprep.subr.bf16.mxu0 0
  %1538 = vmatpush1.bf16.msra.mxu0 0
  %1539 = vmatprep.subr.bf16.mxu0 0
  %1540 = vmatpush1.bf16.msra.mxu0 0
  %1541 = vmatprep.subr.bf16.mxu0 0
  %1542 = vmatpush1.bf16.msra.mxu0 0
  %1543 = vmatprep.subr.bf16.mxu0 0
  %1544 = vmatpush1.bf16.msra.mxu0 %v472
  %1545 = vmatprep.subr.bf16.mxu0 0
  %1546 = vmatpush1.bf16.msra.mxu0 %v471
  %1547 = vmatprep.subr.bf16.mxu0 0
  %1548 = vmatpush1.bf16.msra.mxu0 %v470
  %1549 = vmatprep.subr.bf16.mxu0 0
  %1550 = vmatpush1.bf16.msra.mxu0 %v469
  %1551 = vmatprep.subr.bf16.mxu0 0
  %1552 = vmatpush2.bf16.msra.mxu0 0
  %1553 = vmatprep.subr.bf16.mxu0 0
  %1554 = vmatpush2.bf16.msra.mxu0 0
  %1555 = vmatprep.subr.bf16.mxu0 0
  %1556 = vmatpush2.bf16.msra.mxu0 0
  %1557 = vmatprep.subr.bf16.mxu0 0
  %1558 = vmatpush2.bf16.msra.mxu0 0
  %1559 = vmatprep.subr.bf16.mxu0 0
  %1560 = vmatpush2.bf16.msra.mxu0 0
  %1561 = vmatprep.subr.bf16.mxu0 0
  %1562 = vmatpush2.bf16.msra.mxu0 0
  %1563 = vmatprep.subr.bf16.mxu0 0
  %1564 = vmatpush2.bf16.msra.mxu0 0
  %1565 = vmatprep.subr.bf16.mxu0 0
  %1566 = vmatpush2.bf16.msra.mxu0 0
  %1567 = vmatprep.mubr.bf16.mxu0 0
  %1568 = vmatmul.mubr.bf16.gmra.mxu0 %v1533
  %v1569 = vpop.f32.mrf.mxu0
  %v1570 = vadd.f32 %v1530, %v1569
  %v1571 = vpop.f32.mrf.mxu0
  %v1572 = vpop.f32.mrf.mxu0
  %v1573 = vpop.f32.mrf.mxu0
  %1574 = vdwg.mxu0
  %v1575 = vrot.slane %v207, 4
  %1577 = vmatprep.subr.bf16.mxu0 0
  %1578 = vmatpush1.bf16.msra.mxu0 0
  %1579 = vmatprep.subr.bf16.mxu0 0
  %1580 = vmatpush1.bf16.msra.mxu0 0
  %1581 = vmatprep.subr.bf16.mxu0 0
  %1582 = vmatpush1.bf16.msra.mxu0 0
  %1583 = vmatprep.subr.bf16.mxu0 0
  %1584 = vmatpush1.bf16.msra.mxu0 0
  %1585 = vmatprep.subr.bf16.mxu0 0
  %1586 = vmatpush1.bf16.msra.mxu0 %v543
  %1587 = vmatprep.subr.bf16.mxu0 0
  %1588 = vmatpush1.bf16.msra.mxu0 %v542
  %1589 = vmatprep.subr.bf16.mxu0 0
  %1590 = vmatpush1.bf16.msra.mxu0 %v541
  %1591 = vmatprep.subr.bf16.mxu0 0
  %1592 = vmatpush1.bf16.msra.mxu0 %v540
  %1593 = vmatprep.subr.bf16.mxu0 0
  %1594 = vmatpush2.bf16.msra.mxu0 0
  %1595 = vmatprep.subr.bf16.mxu0 0
  %1596 = vmatpush2.bf16.msra.mxu0 0
  %1597 = vmatprep.subr.bf16.mxu0 0
  %1598 = vmatpush2.bf16.msra.mxu0 0
  %1599 = vmatprep.subr.bf16.mxu0 0
  %1600 = vmatpush2.bf16.msra.mxu0 0
  %1601 = vmatprep.subr.bf16.mxu0 0
  %1602 = vmatpush2.bf16.msra.mxu0 0
  %1603 = vmatprep.subr.bf16.mxu0 0
  %1604 = vmatpush2.bf16.msra.mxu0 0
  %1605 = vmatprep.subr.bf16.mxu0 0
  %1606 = vmatpush2.bf16.msra.mxu0 0
  %1607 = vmatprep.subr.bf16.mxu0 0
  %1608 = vmatpush2.bf16.msra.mxu0 0
  %1609 = vmatprep.mubr.bf16.mxu0 0
  %1610 = vmatmul.mubr.bf16.gmra.mxu0 %v1533
  %v1611 = vpop.f32.mrf.mxu0
  %v1612 = vadd.f32 %v1575, %v1611
  %v1613 = vpop.f32.mrf.mxu0
  %v1614 = vpop.f32.mrf.mxu0
  %v1615 = vpop.f32.mrf.mxu0
  %1616 = vdwg.mxu0
  %v1617 = vrot.slane %v295, 4
  %1619 = vmatprep.subr.bf16.mxu0 0
  %1620 = vmatpush1.bf16.msra.mxu0 0
  %1621 = vmatprep.subr.bf16.mxu0 0
  %1622 = vmatpush1.bf16.msra.mxu0 0
  %1623 = vmatprep.subr.bf16.mxu0 0
  %1624 = vmatpush1.bf16.msra.mxu0 0
  %1625 = vmatprep.subr.bf16.mxu0 0
  %1626 = vmatpush1.bf16.msra.mxu0 0
  %1627 = vmatprep.subr.bf16.mxu0 0
  %1628 = vmatpush1.bf16.msra.mxu0 %v610
  %1629 = vmatprep.subr.bf16.mxu0 0
  %1630 = vmatpush1.bf16.msra.mxu0 %v609
  %1631 = vmatprep.subr.bf16.mxu0 0
  %1632 = vmatpush1.bf16.msra.mxu0 %v608
  %1633 = vmatprep.subr.bf16.mxu0 0
  %1634 = vmatpush1.bf16.msra.mxu0 %v607
  %1635 = vmatprep.subr.bf16.mxu0 0
  %1636 = vmatpush2.bf16.msra.mxu0 0
  %1637 = vmatprep.subr.bf16.mxu0 0
  %1638 = vmatpush2.bf16.msra.mxu0 0
  %1639 = vmatprep.subr.bf16.mxu0 0
  %1640 = vmatpush2.bf16.msra.mxu0 0
  %1641 = vmatprep.subr.bf16.mxu0 0
  %1642 = vmatpush2.bf16.msra.mxu0 0
  %1643 = vmatprep.subr.bf16.mxu0 0
  %1644 = vmatpush2.bf16.msra.mxu0 0
  %1645 = vmatprep.subr.bf16.mxu0 0
  %1646 = vmatpush2.bf16.msra.mxu0 0
  %1647 = vmatprep.subr.bf16.mxu0 0
  %1648 = vmatpush2.bf16.msra.mxu0 0
  %1649 = vmatprep.subr.bf16.mxu0 0
  %1650 = vmatpush2.bf16.msra.mxu0 0
  %1651 = vmatprep.mubr.bf16.mxu0 0
  %1652 = vmatmul.mubr.bf16.gmra.mxu0 %v1533
  %v1653 = vpop.f32.mrf.mxu0
  %v1654 = vadd.f32 %v1617, %v1653
  %v1655 = vpop.f32.mrf.mxu0
  %v1656 = vpop.f32.mrf.mxu0
  %v1657 = vpop.f32.mrf.mxu0
  %1658 = vdwg.mxu0
  %v1659 = vrot.slane %v383, 4
  %1661 = vmatprep.subr.bf16.mxu0 0
  %1662 = vmatpush1.bf16.msra.mxu0 0
  %1663 = vmatprep.subr.bf16.mxu0 0
  %1664 = vmatpush1.bf16.msra.mxu0 0
  %1665 = vmatprep.subr.bf16.mxu0 0
  %1666 = vmatpush1.bf16.msra.mxu0 0
  %1667 = vmatprep.subr.bf16.mxu0 0
  %1668 = vmatpush1.bf16.msra.mxu0 0
  %1669 = vmatprep.subr.bf16.mxu0 0
  %1670 = vmatpush1.bf16.msra.mxu0 %v677
  %1671 = vmatprep.subr.bf16.mxu0 0
  %1672 = vmatpush1.bf16.msra.mxu0 %v676
  %1673 = vmatprep.subr.bf16.mxu0 0
  %1674 = vmatpush1.bf16.msra.mxu0 %v675
  %1675 = vmatprep.subr.bf16.mxu0 0
  %1676 = vmatpush1.bf16.msra.mxu0 %v674
  %1677 = vmatprep.subr.bf16.mxu0 0
  %1678 = vmatpush2.bf16.msra.mxu0 0
  %1679 = vmatprep.subr.bf16.mxu0 0
  %1680 = vmatpush2.bf16.msra.mxu0 0
  %1681 = vmatprep.subr.bf16.mxu0 0
  %1682 = vmatpush2.bf16.msra.mxu0 0
  %1683 = vmatprep.subr.bf16.mxu0 0
  %1684 = vmatpush2.bf16.msra.mxu0 0
  %1685 = vmatprep.subr.bf16.mxu0 0
  %1686 = vmatpush2.bf16.msra.mxu0 0
  %1687 = vmatprep.subr.bf16.mxu0 0
  %1688 = vmatpush2.bf16.msra.mxu0 0
  %1689 = vmatprep.subr.bf16.mxu0 0
  %1690 = vmatpush2.bf16.msra.mxu0 0
  %1691 = vmatprep.subr.bf16.mxu0 0
  %1692 = vmatpush2.bf16.msra.mxu0 0
  %1693 = vmatprep.mubr.bf16.mxu0 0
  %1694 = vmatmul.mubr.bf16.gmra.mxu0 %v1533
  %v1695 = vpop.f32.mrf.mxu0
  %v1696 = vadd.f32 %v1659, %v1695
  %v1697 = vpop.f32.mrf.mxu0
  %v1698 = vpop.f32.mrf.mxu0
  %v1699 = vpop.f32.mrf.mxu0
  %1700 = vdwg.mxu0
  %v1701 = vxor.u32 %v1570, 2147483648
  %v1702 = vmul.f32 %v1701, 1.442695
  %v1703 = vpow.pop %v1702
  %v1704 = vadd.f32 %v1703, 1.0
  %v1705 = vrcp.pop %v1704
  %v1706 = vmul.f32 1.0, %v1705
  %v1707 = vxor.u32 %v1612, 2147483648
  %v1708 = vmul.f32 %v1707, 1.442695
  %v1709 = vpow.pop %v1708
  %v1710 = vadd.f32 %v1709, 1.0
  %v1711 = vrcp.pop %v1710
  %v1712 = vmul.f32 1.0, %v1711
  %v1713 = vtanh.pop %v1654
  %v1714 = vxor.u32 %v1696, 2147483648
  %v1715 = vmul.f32 %v1714, 1.442695
  %v1716 = vpow.pop %v1715
  %v1717 = vadd.f32 %v1716, 1.0
  %v1718 = vrcp.pop %v1717
  %v1719 = vmul.f32 1.0, %v1718
  %v1720 = vmul.f32 %v1712, %v1526
  %v1721 = vmul.f32 %v1706, %v1713
  %v1722 = vadd.f32 %v1720, %v1721
  %v1723 = vtanh.pop %v1722
  %v1724 = vmul.f32 %v1719, %v1723
  %v1725 = vpack.c.bf16 %v1724, %v1724
  %v1726 = vrot.slane %v119, 6
  %v1729 = vsel %vm480, %v1725, 0
  %1731 = vmatprep.subr.bf16.mxu0 0
  %1732 = vmatpush1.bf16.msra.mxu0 0
  %1733 = vmatprep.subr.bf16.mxu0 0
  %1734 = vmatpush1.bf16.msra.mxu0 0
  %1735 = vmatprep.subr.bf16.mxu0 0
  %1736 = vmatpush1.bf16.msra.mxu0 0
  %1737 = vmatprep.subr.bf16.mxu0 0
  %1738 = vmatpush1.bf16.msra.mxu0 0
  %1739 = vmatprep.subr.bf16.mxu0 0
  %1740 = vmatpush1.bf16.msra.mxu0 %v472
  %1741 = vmatprep.subr.bf16.mxu0 0
  %1742 = vmatpush1.bf16.msra.mxu0 %v471
  %1743 = vmatprep.subr.bf16.mxu0 0
  %1744 = vmatpush1.bf16.msra.mxu0 %v470
  %1745 = vmatprep.subr.bf16.mxu0 0
  %1746 = vmatpush1.bf16.msra.mxu0 %v469
  %1747 = vmatprep.subr.bf16.mxu0 0
  %1748 = vmatpush2.bf16.msra.mxu0 0
  %1749 = vmatprep.subr.bf16.mxu0 0
  %1750 = vmatpush2.bf16.msra.mxu0 0
  %1751 = vmatprep.subr.bf16.mxu0 0
  %1752 = vmatpush2.bf16.msra.mxu0 0
  %1753 = vmatprep.subr.bf16.mxu0 0
  %1754 = vmatpush2.bf16.msra.mxu0 0
  %1755 = vmatprep.subr.bf16.mxu0 0
  %1756 = vmatpush2.bf16.msra.mxu0 0
  %1757 = vmatprep.subr.bf16.mxu0 0
  %1758 = vmatpush2.bf16.msra.mxu0 0
  %1759 = vmatprep.subr.bf16.mxu0 0
  %1760 = vmatpush2.bf16.msra.mxu0 0
  %1761 = vmatprep.subr.bf16.mxu0 0
  %1762 = vmatpush2.bf16.msra.mxu0 0
  %1763 = vmatprep.mubr.bf16.mxu0 0
  %1764 = vmatmul.mubr.bf16.gmra.mxu0 %v1729
  %v1765 = vpop.f32.mrf.mxu0
  %v1766 = vadd.f32 %v1726, %v1765
  %v1767 = vpop.f32.mrf.mxu0
  %v1768 = vpop.f32.mrf.mxu0
  %v1769 = vpop.f32.mrf.mxu0
  %1770 = vdwg.mxu0
  %v1771 = vrot.slane %v207, 6
  %1773 = vmatprep.subr.bf16.mxu0 0
  %1774 = vmatpush1.bf16.msra.mxu0 0
  %1775 = vmatprep.subr.bf16.mxu0 0
  %1776 = vmatpush1.bf16.msra.mxu0 0
  %1777 = vmatprep.subr.bf16.mxu0 0
  %1778 = vmatpush1.bf16.msra.mxu0 0
  %1779 = vmatprep.subr.bf16.mxu0 0
  %1780 = vmatpush1.bf16.msra.mxu0 0
  %1781 = vmatprep.subr.bf16.mxu0 0
  %1782 = vmatpush1.bf16.msra.mxu0 %v543
  %1783 = vmatprep.subr.bf16.mxu0 0
  %1784 = vmatpush1.bf16.msra.mxu0 %v542
  %1785 = vmatprep.subr.bf16.mxu0 0
  %1786 = vmatpush1.bf16.msra.mxu0 %v541
  %1787 = vmatprep.subr.bf16.mxu0 0
  %1788 = vmatpush1.bf16.msra.mxu0 %v540
  %1789 = vmatprep.subr.bf16.mxu0 0
  %1790 = vmatpush2.bf16.msra.mxu0 0
  %1791 = vmatprep.subr.bf16.mxu0 0
  %1792 = vmatpush2.bf16.msra.mxu0 0
  %1793 = vmatprep.subr.bf16.mxu0 0
  %1794 = vmatpush2.bf16.msra.mxu0 0
  %1795 = vmatprep.subr.bf16.mxu0 0
  %1796 = vmatpush2.bf16.msra.mxu0 0
  %1797 = vmatprep.subr.bf16.mxu0 0
  %1798 = vmatpush2.bf16.msra.mxu0 0
  %1799 = vmatprep.subr.bf16.mxu0 0
  %1800 = vmatpush2.bf16.msra.mxu0 0
  %1801 = vmatprep.subr.bf16.mxu0 0
  %1802 = vmatpush2.bf16.msra.mxu0 0
  %1803 = vmatprep.subr.bf16.mxu0 0
  %1804 = vmatpush2.bf16.msra.mxu0 0
  %1805 = vmatprep.mubr.bf16.mxu0 0
  %1806 = vmatmul.mubr.bf16.gmra.mxu0 %v1729
  %v1807 = vpop.f32.mrf.mxu0
  %v1808 = vadd.f32 %v1771, %v1807
  %v1809 = vpop.f32.mrf.mxu0
  %v1810 = vpop.f32.mrf.mxu0
  %v1811 = vpop.f32.mrf.mxu0
  %1812 = vdwg.mxu0
  %v1813 = vrot.slane %v295, 6
  %1815 = vmatprep.subr.bf16.mxu0 0
  %1816 = vmatpush1.bf16.msra.mxu0 0
  %1817 = vmatprep.subr.bf16.mxu0 0
  %1818 = vmatpush1.bf16.msra.mxu0 0
  %1819 = vmatprep.subr.bf16.mxu0 0
  %1820 = vmatpush1.bf16.msra.mxu0 0
  %1821 = vmatprep.subr.bf16.mxu0 0
  %1822 = vmatpush1.bf16.msra.mxu0 0
  %1823 = vmatprep.subr.bf16.mxu0 0
  %1824 = vmatpush1.bf16.msra.mxu0 %v610
  %1825 = vmatprep.subr.bf16.mxu0 0
  %1826 = vmatpush1.bf16.msra.mxu0 %v609
  %1827 = vmatprep.subr.bf16.mxu0 0
  %1828 = vmatpush1.bf16.msra.mxu0 %v608
  %1829 = vmatprep.subr.bf16.mxu0 0
  %1830 = vmatpush1.bf16.msra.mxu0 %v607
  %1831 = vmatprep.subr.bf16.mxu0 0
  %1832 = vmatpush2.bf16.msra.mxu0 0
  %1833 = vmatprep.subr.bf16.mxu0 0
  %1834 = vmatpush2.bf16.msra.mxu0 0
  %1835 = vmatprep.subr.bf16.mxu0 0
  %1836 = vmatpush2.bf16.msra.mxu0 0
  %1837 = vmatprep.subr.bf16.mxu0 0
  %1838 = vmatpush2.bf16.msra.mxu0 0
  %1839 = vmatprep.subr.bf16.mxu0 0
  %1840 = vmatpush2.bf16.msra.mxu0 0
  %1841 = vmatprep.subr.bf16.mxu0 0
  %1842 = vmatpush2.bf16.msra.mxu0 0
  %1843 = vmatprep.subr.bf16.mxu0 0
  %1844 = vmatpush2.bf16.msra.mxu0 0
  %1845 = vmatprep.subr.bf16.mxu0 0
  %1846 = vmatpush2.bf16.msra.mxu0 0
  %1847 = vmatprep.mubr.bf16.mxu0 0
  %1848 = vmatmul.mubr.bf16.gmra.mxu0 %v1729
  %v1849 = vpop.f32.mrf.mxu0
  %v1850 = vadd.f32 %v1813, %v1849
  %v1851 = vpop.f32.mrf.mxu0
  %v1852 = vpop.f32.mrf.mxu0
  %v1853 = vpop.f32.mrf.mxu0
  %1854 = vdwg.mxu0
  %v1855 = vrot.slane %v383, 6
  %1857 = vmatprep.subr.bf16.mxu0 0
  %1858 = vmatpush1.bf16.msra.mxu0 0
  %1859 = vmatprep.subr.bf16.mxu0 0
  %1860 = vmatpush1.bf16.msra.mxu0 0
  %1861 = vmatprep.subr.bf16.mxu0 0
  %1862 = vmatpush1.bf16.msra.mxu0 0
  %1863 = vmatprep.subr.bf16.mxu0 0
  %1864 = vmatpush1.bf16.msra.mxu0 0
  %1865 = vmatprep.subr.bf16.mxu0 0
  %1866 = vmatpush1.bf16.msra.mxu0 %v677
  %1867 = vmatprep.subr.bf16.mxu0 0
  %1868 = vmatpush1.bf16.msra.mxu0 %v676
  %1869 = vmatprep.subr.bf16.mxu0 0
  %1870 = vmatpush1.bf16.msra.mxu0 %v675
  %1871 = vmatprep.subr.bf16.mxu0 0
  %1872 = vmatpush1.bf16.msra.mxu0 %v674
  %1873 = vmatprep.subr.bf16.mxu0 0
  %1874 = vmatpush2.bf16.msra.mxu0 0
  %1875 = vmatprep.subr.bf16.mxu0 0
  %1876 = vmatpush2.bf16.msra.mxu0 0
  %1877 = vmatprep.subr.bf16.mxu0 0
  %1878 = vmatpush2.bf16.msra.mxu0 0
  %1879 = vmatprep.subr.bf16.mxu0 0
  %1880 = vmatpush2.bf16.msra.mxu0 0
  %1881 = vmatprep.subr.bf16.mxu0 0
  %1882 = vmatpush2.bf16.msra.mxu0 0
  %1883 = vmatprep.subr.bf16.mxu0 0
  %1884 = vmatpush2.bf16.msra.mxu0 0
  %1885 = vmatprep.subr.bf16.mxu0 0
  %1886 = vmatpush2.bf16.msra.mxu0 0
  %1887 = vmatprep.subr.bf16.mxu0 0
  %1888 = vmatpush2.bf16.msra.mxu0 0
  %1889 = vmatprep.mubr.bf16.mxu0 0
  %1890 = vmatmul.mubr.bf16.gmra.mxu0 %v1729
  %v1891 = vpop.f32.mrf.mxu0
  %v1892 = vadd.f32 %v1855, %v1891
  %v1893 = vpop.f32.mrf.mxu0
  %v1894 = vpop.f32.mrf.mxu0
  %v1895 = vpop.f32.mrf.mxu0
  %1896 = vdwg.mxu0
  %v1897 = vxor.u32 %v1766, 2147483648
  %v1898 = vmul.f32 %v1897, 1.442695
  %v1899 = vpow.pop %v1898
  %v1900 = vadd.f32 %v1899, 1.0
  %v1901 = vrcp.pop %v1900
  %v1902 = vmul.f32 1.0, %v1901
  %v1903 = vxor.u32 %v1808, 2147483648
  %v1904 = vmul.f32 %v1903, 1.442695
  %v1905 = vpow.pop %v1904
  %v1906 = vadd.f32 %v1905, 1.0
  %v1907 = vrcp.pop %v1906
  %v1908 = vmul.f32 1.0, %v1907
  %v1909 = vtanh.pop %v1850
  %v1910 = vxor.u32 %v1892, 2147483648
  %v1911 = vmul.f32 %v1910, 1.442695
  %v1912 = vpow.pop %v1911
  %v1913 = vadd.f32 %v1912, 1.0
  %v1914 = vrcp.pop %v1913
  %v1915 = vmul.f32 1.0, %v1914
  %v1916 = vmul.f32 %v1908, %v1722
  %v1917 = vmul.f32 %v1902, %v1909
  %v1918 = vadd.f32 %v1916, %v1917
  %v1919 = vtanh.pop %v1918
  %v1920 = vmul.f32 %v1915, %v1919
  %v1921 = vpack.c.bf16 %v1920, %v1920
  %v1923 = vsel %vm480, %v1921, 0
  %1925 = vmatprep.subr.bf16.mxu0 0
  %1926 = vmatpush1.bf16.msra.mxu0 0
  %1927 = vmatprep.subr.bf16.mxu0 0
  %1928 = vmatpush1.bf16.msra.mxu0 0
  %1929 = vmatprep.subr.bf16.mxu0 0
  %1930 = vmatpush1.bf16.msra.mxu0 0
  %1931 = vmatprep.subr.bf16.mxu0 0
  %1932 = vmatpush1.bf16.msra.mxu0 0
  %1933 = vmatprep.subr.bf16.mxu0 0
  %1934 = vmatpush1.bf16.msra.mxu0 %v472
  %1935 = vmatprep.subr.bf16.mxu0 0
  %1936 = vmatpush1.bf16.msra.mxu0 %v471
  %1937 = vmatprep.subr.bf16.mxu0 0
  %1938 = vmatpush1.bf16.msra.mxu0 %v470
  %1939 = vmatprep.subr.bf16.mxu0 0
  %1940 = vmatpush1.bf16.msra.mxu0 %v469
  %1941 = vmatprep.subr.bf16.mxu0 0
  %1942 = vmatpush2.bf16.msra.mxu0 0
  %1943 = vmatprep.subr.bf16.mxu0 0
  %1944 = vmatpush2.bf16.msra.mxu0 0
  %1945 = vmatprep.subr.bf16.mxu0 0
  %1946 = vmatpush2.bf16.msra.mxu0 0
  %1947 = vmatprep.subr.bf16.mxu0 0
  %1948 = vmatpush2.bf16.msra.mxu0 0
  %1949 = vmatprep.subr.bf16.mxu0 0
  %1950 = vmatpush2.bf16.msra.mxu0 0
  %1951 = vmatprep.subr.bf16.mxu0 0
  %1952 = vmatpush2.bf16.msra.mxu0 0
  %1953 = vmatprep.subr.bf16.mxu0 0
  %1954 = vmatpush2.bf16.msra.mxu0 0
  %1955 = vmatprep.subr.bf16.mxu0 0
  %1956 = vmatpush2.bf16.msra.mxu0 0
  %1957 = vmatprep.mubr.bf16.mxu0 0
  %1958 = vmatmul.mubr.bf16.gmra.mxu0 %v1923
  %v1959 = vpop.f32.mrf.mxu0
  %v1960 = vadd.f32 %v1726, %v1959
  %v1961 = vpop.f32.mrf.mxu0
  %v1962 = vpop.f32.mrf.mxu0
  %v1963 = vpop.f32.mrf.mxu0
  %1964 = vdwg.mxu0
  %1965 = vmatprep.subr.bf16.mxu0 0
  %1966 = vmatpush1.bf16.msra.mxu0 0
  %1967 = vmatprep.subr.bf16.mxu0 0
  %1968 = vmatpush1.bf16.msra.mxu0 0
  %1969 = vmatprep.subr.bf16.mxu0 0
  %1970 = vmatpush1.bf16.msra.mxu0 0
  %1971 = vmatprep.subr.bf16.mxu0 0
  %1972 = vmatpush1.bf16.msra.mxu0 0
  %1973 = vmatprep.subr.bf16.mxu0 0
  %1974 = vmatpush1.bf16.msra.mxu0 %v543
  %1975 = vmatprep.subr.bf16.mxu0 0
  %1976 = vmatpush1.bf16.msra.mxu0 %v542
  %1977 = vmatprep.subr.bf16.mxu0 0
  %1978 = vmatpush1.bf16.msra.mxu0 %v541
  %1979 = vmatprep.subr.bf16.mxu0 0
  %1980 = vmatpush1.bf16.msra.mxu0 %v540
  %1981 = vmatprep.subr.bf16.mxu0 0
  %1982 = vmatpush2.bf16.msra.mxu0 0
  %1983 = vmatprep.subr.bf16.mxu0 0
  %1984 = vmatpush2.bf16.msra.mxu0 0
  %1985 = vmatprep.subr.bf16.mxu0 0
  %1986 = vmatpush2.bf16.msra.mxu0 0
  %1987 = vmatprep.subr.bf16.mxu0 0
  %1988 = vmatpush2.bf16.msra.mxu0 0
  %1989 = vmatprep.subr.bf16.mxu0 0
  %1990 = vmatpush2.bf16.msra.mxu0 0
  %1991 = vmatprep.subr.bf16.mxu0 0
  %1992 = vmatpush2.bf16.msra.mxu0 0
  %1993 = vmatprep.subr.bf16.mxu0 0
  %1994 = vmatpush2.bf16.msra.mxu0 0
  %1995 = vmatprep.subr.bf16.mxu0 0
  %1996 = vmatpush2.bf16.msra.mxu0 0
  %1997 = vmatprep.mubr.bf16.mxu0 0
  %1998 = vmatmul.mubr.bf16.gmra.mxu0 %v1923
  %v1999 = vpop.f32.mrf.mxu0
  %v2000 = vadd.f32 %v1771, %v1999
  %v2001 = vpop.f32.mrf.mxu0
  %v2002 = vpop.f32.mrf.mxu0
  %v2003 = vpop.f32.mrf.mxu0
  %2004 = vdwg.mxu0
  %2005 = vmatprep.subr.bf16.mxu0 0
  %2006 = vmatpush1.bf16.msra.mxu0 0
  %2007 = vmatprep.subr.bf16.mxu0 0
  %2008 = vmatpush1.bf16.msra.mxu0 0
  %2009 = vmatprep.subr.bf16.mxu0 0
  %2010 = vmatpush1.bf16.msra.mxu0 0
  %2011 = vmatprep.subr.bf16.mxu0 0
  %2012 = vmatpush1.bf16.msra.mxu0 0
  %2013 = vmatprep.subr.bf16.mxu0 0
  %2014 = vmatpush1.bf16.msra.mxu0 %v610
  %2015 = vmatprep.subr.bf16.mxu0 0
  %2016 = vmatpush1.bf16.msra.mxu0 %v609
  %2017 = vmatprep.subr.bf16.mxu0 0
  %2018 = vmatpush1.bf16.msra.mxu0 %v608
  %2019 = vmatprep.subr.bf16.mxu0 0
  %2020 = vmatpush1.bf16.msra.mxu0 %v607
  %2021 = vmatprep.subr.bf16.mxu0 0
  %2022 = vmatpush2.bf16.msra.mxu0 0
  %2023 = vmatprep.subr.bf16.mxu0 0
  %2024 = vmatpush2.bf16.msra.mxu0 0
  %2025 = vmatprep.subr.bf16.mxu0 0
  %2026 = vmatpush2.bf16.msra.mxu0 0
  %2027 = vmatprep.subr.bf16.mxu0 0
  %2028 = vmatpush2.bf16.msra.mxu0 0
  %2029 = vmatprep.subr.bf16.mxu0 0
  %2030 = vmatpush2.bf16.msra.mxu0 0
  %2031 = vmatprep.subr.bf16.mxu0 0
  %2032 = vmatpush2.bf16.msra.mxu0 0
  %2033 = vmatprep.subr.bf16.mxu0 0
  %2034 = vmatpush2.bf16.msra.mxu0 0
  %2035 = vmatprep.subr.bf16.mxu0 0
  %2036 = vmatpush2.bf16.msra.mxu0 0
  %2037 = vmatprep.mubr.bf16.mxu0 0
  %2038 = vmatmul.mubr.bf16.gmra.mxu0 %v1923
  %v2039 = vpop.f32.mrf.mxu0
  %v2040 = vadd.f32 %v1813, %v2039
  %v2041 = vpop.f32.mrf.mxu0
  %v2042 = vpop.f32.mrf.mxu0
  %v2043 = vpop.f32.mrf.mxu0
  %2044 = vdwg.mxu0
  %2045 = vmatprep.subr.bf16.mxu0 0
  %2046 = vmatpush1.bf16.msra.mxu0 0
  %2047 = vmatprep.subr.bf16.mxu0 0
  %2048 = vmatpush1.bf16.msra.mxu0 0
  %2049 = vmatprep.subr.bf16.mxu0 0
  %2050 = vmatpush1.bf16.msra.mxu0 0
  %2051 = vmatprep.subr.bf16.mxu0 0
  %2052 = vmatpush1.bf16.msra.mxu0 0
  %2053 = vmatprep.subr.bf16.mxu0 0
  %2054 = vmatpush1.bf16.msra.mxu0 %v677
  %2055 = vmatprep.subr.bf16.mxu0 0
  %2056 = vmatpush1.bf16.msra.mxu0 %v676
  %2057 = vmatprep.subr.bf16.mxu0 0
  %2058 = vmatpush1.bf16.msra.mxu0 %v675
  %2059 = vmatprep.subr.bf16.mxu0 0
  %2060 = vmatpush1.bf16.msra.mxu0 %v674
  %2061 = vmatprep.subr.bf16.mxu0 0
  %2062 = vmatpush2.bf16.msra.mxu0 0
  %2063 = vmatprep.subr.bf16.mxu0 0
  %2064 = vmatpush2.bf16.msra.mxu0 0
  %2065 = vmatprep.subr.bf16.mxu0 0
  %2066 = vmatpush2.bf16.msra.mxu0 0
  %2067 = vmatprep.subr.bf16.mxu0 0
  %2068 = vmatpush2.bf16.msra.mxu0 0
  %2069 = vmatprep.subr.bf16.mxu0 0
  %2070 = vmatpush2.bf16.msra.mxu0 0
  %2071 = vmatprep.subr.bf16.mxu0 0
  %2072 = vmatpush2.bf16.msra.mxu0 0
  %2073 = vmatprep.subr.bf16.mxu0 0
  %2074 = vmatpush2.bf16.msra.mxu0 0
  %2075 = vmatprep.subr.bf16.mxu0 0
  %2076 = vmatpush2.bf16.msra.mxu0 0
  %2077 = vmatprep.mubr.bf16.mxu0 0
  %2078 = vmatmul.mubr.bf16.gmra.mxu0 %v1923
  %v2079 = vpop.f32.mrf.mxu0
  %v2080 = vadd.f32 %v1855, %v2079
  %v2081 = vpop.f32.mrf.mxu0
  %v2082 = vpop.f32.mrf.mxu0
  %v2083 = vpop.f32.mrf.mxu0
  %2084 = vdwg.mxu0
  %v2085 = vxor.u32 %v1960, 2147483648
  %v2086 = vmul.f32 %v2085, 1.442695
  %v2087 = vpow.pop %v2086
  %v2088 = vadd.f32 %v2087, 1.0
  %v2089 = vrcp.pop %v2088
  %v2090 = vmul.f32 1.0, %v2089
  %v2091 = vxor.u32 %v2000, 2147483648
  %v2092 = vmul.f32 %v2091, 1.442695
  %v2093 = vpow.pop %v2092
  %v2094 = vadd.f32 %v2093, 1.0
  %v2095 = vrcp.pop %v2094
  %v2096 = vmul.f32 1.0, %v2095
  %v2097 = vtanh.pop %v2040
  %v2098 = vxor.u32 %v2080, 2147483648
  %v2099 = vmul.f32 %v2098, 1.442695
  %v2100 = vpow.pop %v2099
  %v2101 = vadd.f32 %v2100, 1.0
  %v2102 = vrcp.pop %v2101
  %v2103 = vmul.f32 1.0, %v2102
  %v2104 = vmul.f32 %v2096, %v1918
  %v2105 = vmul.f32 %v2090, %v2097
  %v2106 = vadd.f32 %v2104, %v2105
  %v2107 = vtanh.pop %v2106
  %v2108 = vmul.f32 %v2103, %v2107
  %v2109 = vmax.f32 %v2108, 0.0
  %v2110 = vld [vmem:[%s4] sm:$0x1]
  %v2112 = vlaneseq
  %v2113 = vshrl.u32 %v2112, 7
  %v2114 = vsub.s32 0, %v2113
  %v2115 = vrot.slane %v2110, %v2114
  %v2117 = vmul.f32 %v2109, %v2115
  %vm2118 = vcmask 517120
  %v2119 = vsel %vm2118, %v2117, 0.0
  %2120 = vadd.xlane.f32.xlu0 %v2119
  %v2121 = vpop.xlane.xlu0 %2120
  %v2122 = vld [vmem:[#allocation2] sm:$0x1]
  %v2124 = vlaneseq
  %v2125 = vshrl.u32 %v2124, 7
  %v2126 = vsub.s32 0, %v2125
  %v2127 = vrot.slane %v2122, %v2126
  %v2129 = vadd.f32 %v2121, %v2127
  %vm2130 = vcmask 1024
  %2131 = vst.msk [vmem:[%s6] sm:$0x3] %vm2130, %v2129
  // Predicated region
  $region26: #{timeseries_forward.1} parent=0 // pred_check
    _
  $region27: #{timeseries_forward.1} parent=0 // pred_check_branch
    %2133 = sbr.rel (0) target = $region29
  $region28: #{timeseries_forward.1} parent=0 // pred_region
    _
  $region29: #{timeseries_forward.1} parent=0 // pred_fallthru
    _
  // Predicated region
  $region30: #{timeseries_forward.1} parent=0 // pred_check
    _
  $region31: #{timeseries_forward.1} parent=0 // pred_check_branch
    %2135 = sbr.rel (0) target = $region33
  $region32: #{timeseries_forward.1} parent=0 // pred_region
    _
  $region33: #{timeseries_forward.1} parent=0 // pred_fallthru
    _

</llo_original>
